<compile_context>
chip_gen: v5e
topology: v5e:2x2
jax: 0.10.0
libtpu: 0.0.40
codegen_flags: <defaults>
</compile_context>

<pallas_src>
import jax
import jax.numpy as jnp
from jax.experimental import pallas as pl
from jax.experimental.pallas import tpu as pltpu


# --------------------------------------------------------------------------- utilities

def _vmem_capacity_bytes(default=64 * 1024 * 1024):
    try:
        return int(pltpu.get_tpu_info().vmem_capacity_bytes)
    except Exception:
        return default


def _choose_o_tile(output_size, hidden, target=4096):
    """Vocab-projection tile: largest multiple of 128 <= `target` that keeps the
    streaming kernel's double-buffered tiles (bf16 wo, f32 bo, bf16 logits for up to
    256 batch rows) inside ~half of this chip's VMEM.  Bigger tiles amortize the fixed
    ~0.35us per-grid-step overhead; the capacity-derived cap (not a halved target)
    handles v7x's 64 MiB VMEM."""
    o128 = ((output_size + 127) // 128) * 128
    budget = _vmem_capacity_bytes() // 2
    per_col = 2 * (hidden * 2) + 2 * (8 * 4) + 2 * (256 * 2)
    max_to = max(128, (budget // per_col) // 128 * 128)
    return max(128, min((target // 128) * 128, max_to, o128))


def _stream_vmem_limit(batch, hidden, o_tile):
    """Scoped-VMEM limit for the streaming kernel computed from actual buffer sizes."""
    b_pad = max(8, ((batch + 7) // 8) * 8)
    need = (2 * hidden * o_tile * 2        # wo tiles (bf16, double-buffered)
            + 2 * 8 * o_tile * 4           # bo tiles (f32, sublane-padded)
            + 2 * b_pad * o_tile * 2       # bf16 logits output tiles
            + 2 * b_pad * hidden * 2       # attn_vec buffers
            + (4 << 20))                   # compiler-internal scratch headroom
    return int(min(_vmem_capacity_bytes(), max(need, 32 << 20)))


# --------------------------------------------------------------------------- kernels

def _state_kernel(
    # inputs
    ids_ref,       # [B]  int32 token ids (SMEM)
    emb_hbm,       # [V, H] f32 embedding table (HBM / pl.ANY), gathered by DMA
    hprev_ref,     # [B, H]  f32 previous GRU hidden
    enc_ref,       # [B, L, H] bf16 encoder outputs
    wih_ref,       # [H, 3H] bf16 GRU W_ih^T (PyTorch gate order r, z, n)
    whh_ref,       # [H, 3H] bf16 GRU W_hh^T
    bih_ref,       # [1, 3H] f32
    bhh_ref,       # [1, 3H] f32
    wcc_ref,       # [H, H]  bf16 Wc^T columns acting on the context vector
    wch_ref,       # [H, H]  bf16 Wc^T columns acting on the rnn output
    bc_ref,        # [1, H]  f32
    # outputs
    attn_vec_ref,  # [B, H]  bf16 attention vector
    hid_ref,       # [B, H]  f32 new hidden
    # scratch
    emb_ref,       # [B, H]  f32 gathered embedding rows
    gather_sem,    # (B,) DMA semaphores
):
    B, H = hprev_ref.shape

    # ---- fused embedding gather: one row-DMA per token; overlap with whh matmul ----
    copies = [
        pltpu.make_async_copy(
            emb_hbm.at[pl.ds(ids_ref[b], 1), :],
            emb_ref.at[pl.ds(b, 1), :],
            gather_sem.at[b],
        )
        for b in range(B)
    ]
    for c in copies:
        c.start()

    h_prev = hprev_ref[...]                             # [B, H] f32
    h_prev_bf = h_prev.astype(jnp.bfloat16)
    # hidden-side GRU matmul does not depend on the gathered embedding -> hides the DMAs
    gh = jnp.dot(h_prev_bf, whh_ref[...], preferred_element_type=jnp.float32) + bhh_ref[...]

    for c in copies:
        c.wait()
    x = emb_ref[...].astype(jnp.bfloat16)               # [B, H]  (dropout p=0 == identity)

    # ---- GRU cell (single layer, single step; PyTorch gate order r, z, n) ----
    gi = jnp.dot(x, wih_ref[...], preferred_element_type=jnp.float32) + bih_ref[...]
    r = jax.nn.sigmoid(gi[:, 0:H] + gh[:, 0:H])
    z = jax.nn.sigmoid(gi[:, H:2 * H] + gh[:, H:2 * H])
    n = jnp.tanh(gi[:, 2 * H:3 * H] + r * gh[:, 2 * H:3 * H])
    h_new = (1.0 - z) * n + z * h_prev                  # [B, H] f32
    hid_ref[...] = h_new
    h_new_bf = h_new.astype(jnp.bfloat16)

    # ---- Luong 'dot' attention: score + context on the VPU/XLU (B*L*H elementwise) ----
    enc = enc_ref[...].astype(jnp.float32)              # [B, L, H]
    s = jnp.sum(enc * h_new[:, None, :], axis=2)        # [B, L]
    s = s - jnp.max(s, axis=1, keepdims=True)
    e = jnp.exp(s)
    attn_w = e * pl.reciprocal(jnp.sum(e, axis=1, keepdims=True), approx=True)
    context = jnp.sum(enc * attn_w[:, :, None], axis=1)  # [B, H] f32

    # ---- attention vector = tanh(Wc [context ; rnn_output]) without a lane concat ----
    av = jnp.tanh(
        jnp.dot(context.astype(jnp.bfloat16), wcc_ref[...],
                preferred_element_type=jnp.float32)
        + jnp.dot(h_new_bf, wch_ref[...], preferred_element_type=jnp.float32)
        + bc_ref[...]
    )
    attn_vec_ref[...] = av.astype(jnp.bfloat16)


def _logits_kernel(attn_ref, wo_ref, bo_ref, logits_ref):
    # Stateless per tile -> safe for dimension_semantics=("parallel",)
    logits_ref[...] = (
        jnp.dot(attn_ref[...], wo_ref[...], preferred_element_type=jnp.float32)
        + bo_ref[...]
    ).astype(logits_ref.dtype)


def _softmax_stats_kernel(x_ref, m_ref, l_ref):
    # Online per-row max / sum(exp) across the vocab tiles (resident outputs).
    @pl.when(pl.program_id(0) == 0)
    def _():
        m_ref[...] = jnp.full(m_ref.shape, -jnp.inf, jnp.float32)
        l_ref[...] = jnp.zeros(l_ref.shape, jnp.float32)

    x = x_ref[...].astype(jnp.float32)
    m_prev = m_ref[...]
    m_new = jnp.maximum(m_prev, jnp.max(x, axis=-1, keepdims=True))
    l_ref[...] = (l_ref[...] * jnp.exp(m_prev - m_new)
                  + jnp.sum(jnp.exp(x - m_new), axis=-1, keepdims=True))
    m_ref[...] = m_new


def _softmax_norm_kernel(x_ref, m_ref, l_ref, o_ref):
    x = x_ref[...].astype(jnp.float32)
    # exact normalization for the returned probabilities (no approx reciprocal)
    o_ref[...] = jnp.exp(x - m_ref[...]) / l_ref[...]


# --------------------------------------------------------------------------- params

def prepare_params(params, *, o_tile=None, o_tile_target=4096):
    """One-time weight prep (hoisted out of the decode loop): transpose for lane-dense
    x @ W matmuls, split Wc so the kernel never concatenates along the lane axis, cast
    matmul weights to bf16 (f32 accumulation in-kernel; biases stay f32), and pad the
    hidden2output vocab dim to a multiple of the chosen O tile (padded logits get a
    -1e30 bias so their softmax probability is 0; the wrapper slices them off)."""
    H = params["w_ih"].shape[1]
    O = params["wo"].shape[0]
    TO = int(o_tile) if o_tile is not None else _choose_o_tile(O, H, target=o_tile_target)
    assert TO % 128 == 0, "o_tile must be a multiple of 128 lanes"
    O_pad = ((O + TO - 1) // TO) * TO

    bf16 = jnp.bfloat16
    wo_t = params["wo"].T.astype(bf16)                       # [H, O]
    bo = params["bo"].astype(jnp.float32)                    # [O]
    if O_pad != O:
        wo_t = jnp.pad(wo_t, ((0, 0), (0, O_pad - O)))
        bo = jnp.pad(bo, (0, O_pad - O), constant_values=-1e30)

    # TODO(synk): int8 wo (per-column scales) on v5e/v6e and fp8-e4m3 on v7x would halve
    # the dominant wo HBM stream; kept bf16 here for a single portable MXU datapath.
    return {
        "embedding": params["embedding"].astype(jnp.float32),   # [V, H] (gathered by DMA)
        # TODO(synk): store the embedding table (and gather scratch) in bf16 to halve
        # gather bytes once single-row packed-dtype DMA is validated on all targets.
        "wih_t": params["w_ih"].T.astype(bf16),                  # [H, 3H] gate order r,z,n
        "whh_t": params["w_hh"].T.astype(bf16),                  # [H, 3H]
        "bih": params["b_ih"][None, :].astype(jnp.float32),      # [1, 3H]
        "bhh": params["b_hh"][None, :].astype(jnp.float32),      # [1, 3H]
        "wc_ctx_t": params["wc"][:, :H].T.astype(bf16),          # [H, H] (context half)
        "wc_hid_t": params["wc"][:, H:].T.astype(bf16),          # [H, H] (rnn-output half)
        "bc": params["bc"][None, :].astype(jnp.float32),         # [1, H]
        "wo_t": wo_t,                                            # [H, O_pad] bf16
        "bo": bo[None, :],                                       # [1, O_pad] f32
        "o_tile": TO,
        "output_size": O,
    }


# --------------------------------------------------------------------------- forward

def luong_attention_decoder_forward(input_single_seq, last_hidden, encoder_output,
                                     prep_params):
    """
    input_single_seq: [B, 1] int32 token ids
    last_hidden:      [1, B, H] f32 (PyTorch GRU hidden layout, n_layers=1)
    encoder_output:   [B, L, H]; pass bf16 (cast once per sequence) to avoid a per-step cast
    prep_params:      output of prepare_params() (pre-transposed / pre-cast / padded, made once)
    returns (output [B, output_size] softmax probabilities f32, current_hidden [1, B, H] f32)
    """
    B = input_single_seq.shape[0]
    H = last_hidden.shape[-1]
    O = prep_params["output_size"]
    O_pad = prep_params["wo_t"].shape[1]
    TO = prep_params["o_tile"]
    n_o_tiles = O_pad // TO

    ids = input_single_seq[:, 0].astype(jnp.int32)
    h_prev = last_hidden[0]                                   # [B, H]
    enc = (encoder_output if encoder_output.dtype == jnp.bfloat16
           else encoder_output.astype(jnp.bfloat16))          # hoist this cast when looping
    # TODO(synk): tile encoder_output over L (online attention softmax) when L is large.

    vmem_ws = pl.BlockSpec(memory_space=pltpu.MemorySpace.VMEM)   # whole-array VMEM operand

    # ---- kernel 1: embedding gather + GRU cell + Luong 'dot' attention + Wc ----------
    attn_vec, h_new = pl.pallas_call(
        _state_kernel,
        out_shape=(jax.ShapeDtypeStruct((B, H), jnp.bfloat16),
                   jax.ShapeDtypeStruct((B, H), jnp.float32)),
        in_specs=[
            pl.BlockSpec(memory_space=pltpu.MemorySpace.SMEM),    # token ids (scalars)
            pl.BlockSpec(memory_space=pl.ANY),                    # embedding table (HBM)
            vmem_ws, vmem_ws,                                     # h_prev, encoder outputs
            vmem_ws, vmem_ws, vmem_ws, vmem_ws,                   # GRU weights / biases
            vmem_ws, vmem_ws, vmem_ws,                            # Wc halves / bias
        ],
        out_specs=(vmem_ws, vmem_ws),
        scratch_shapes=[
            pltpu.VMEM((B, H), jnp.float32),        # gathered embedding rows
            pltpu.SemaphoreType.DMA((B,)),          # per-row gather semaphores
        ],
    )(ids, prep_params["embedding"], h_prev, enc,
      prep_params["wih_t"], prep_params["whh_t"], prep_params["bih"], prep_params["bhh"],
      prep_params["wc_ctx_t"], prep_params["wc_hid_t"], prep_params["bc"])

    # ---- kernel 2: streamed vocab projection (dominant HBM cost at real vocab sizes) --
    logits = pl.pallas_call(
        _logits_kernel,
        out_shape=jax.ShapeDtypeStruct((B, O_pad), jnp.bfloat16),
        grid=(n_o_tiles,),
        in_specs=[
            pl.BlockSpec((B, H), lambda o: (0, 0)),       # attn_vec (tiny, grid-invariant)
            pl.BlockSpec((H, TO), lambda o: (0, o)),      # wo tile (streamed, double-buffered)
            pl.BlockSpec((1, TO), lambda o: (0, o)),      # bo tile
        ],
        out_specs=pl.BlockSpec((B, TO), lambda o: (0, o)),
        compiler_params=pltpu.CompilerParams(
            dimension_semantics=("parallel",),            # stateless tiles -> megacore-shardable
            vmem_limit_bytes=_stream_vmem_limit(B, H, TO),
        ),
    )(attn_vec, prep_params["wo_t"], prep_params["bo"])

    # ---- kernel 3+4: tiled row softmax over the padded vocab (stats, then normalize) --
    m, l = pl.pallas_call(
        _softmax_stats_kernel,
        out_shape=(jax.ShapeDtypeStruct((B, 1), jnp.float32),
                   jax.ShapeDtypeStruct((B, 1), jnp.float32)),
        grid=(n_o_tiles,),
        in_specs=[pl.BlockSpec((B, TO), lambda o: (0, o))],
        out_specs=(pl.BlockSpec((B, 1), lambda o: (0, 0)),
                   pl.BlockSpec((B, 1), lambda o: (0, 0))),
        compiler_params=pltpu.CompilerParams(dimension_semantics=("arbitrary",)),
    )(logits)

    probs = pl.pallas_call(
        _softmax_norm_kernel,
        out_shape=jax.ShapeDtypeStruct((B, O_pad), jnp.float32),
        grid=(n_o_tiles,),
        in_specs=[pl.BlockSpec((B, TO), lambda o: (0, o)),
                  pl.BlockSpec((B, 1), lambda o: (0, 0)),
                  pl.BlockSpec((B, 1), lambda o: (0, 0))],
        out_specs=pl.BlockSpec((B, TO), lambda o: (0, o)),
        compiler_params=pltpu.CompilerParams(dimension_semantics=("parallel",)),
    )(logits, m, l)

    output = probs[:, :O] if O_pad != O else probs
    return output, h_new[None, :, :]       # current_hidden back to [1, B, H]


# --------------------------------------------------------------------------- test rig

def _init_params(key, vocab_size, hidden_size, output_size):
    ks = jax.random.split(key, 10)
    s = 0.1
    return {
        "embedding": s * jax.random.normal(ks[0], (vocab_size, hidden_size), jnp.float32),
        "w_ih": s * jax.random.normal(ks[1], (3 * hidden_size, hidden_size), jnp.float32),
        "w_hh": s * jax.random.normal(ks[2], (3 * hidden_size, hidden_size), jnp.float32),
        "b_ih": s * jax.random.normal(ks[3], (3 * hidden_size,), jnp.float32),
        "b_hh": s * jax.random.normal(ks[4], (3 * hidden_size,), jnp.float32),
        "wc": s * jax.random.normal(ks[5], (hidden_size, 2 * hidden_size), jnp.float32),
        "bc": s * jax.random.normal(ks[6], (hidden_size,), jnp.float32),
        "wo": s * jax.random.normal(ks[7], (output_size, hidden_size), jnp.float32),
        "bo": s * jax.random.normal(ks[8], (output_size,), jnp.float32),
    }


def _reference_forward(input_single_seq, last_hidden, encoder_output, params):
    """Pure-JAX f32 reference with PyTorch semantics (GRU, dot attention, Wc, softmax)."""
    H = params["w_ih"].shape[1]
    x = params["embedding"][input_single_seq[:, 0]]
    h = last_hidden[0]
    gi = x @ params["w_ih"].T + params["b_ih"]
    gh = h @ params["w_hh"].T + params["b_hh"]
    r = jax.nn.sigmoid(gi[:, :H] + gh[:, :H])
    z = jax.nn.sigmoid(gi[:, H:2 * H] + gh[:, H:2 * H])
    n = jnp.tanh(gi[:, 2 * H:] + r * gh[:, 2 * H:])
    h_new = (1.0 - z) * n + z * h
    score = jnp.sum(encoder_output * h_new[:, None, :], axis=2)
    attn_w = jax.nn.softmax(score, axis=1)
    context = jnp.sum(encoder_output * attn_w[:, :, None], axis=1)
    cat = jnp.concatenate([context, h_new], axis=1)       # spec order: [context, rnn_output]
    av = jnp.tanh(cat @ params["wc"].T + params["bc"])
    logits = av @ params["wo"].T + params["bo"]
    out = jax.nn.softmax(logits, axis=1)
    return out, h_new[None]


if __name__ == "__main__":
    # Small but vreg-friendly demo shapes: B=8 fills the sublanes, H=128 is one lane
    # tile, O=500 is deliberately NOT 128-aligned (exercises the padded vocab path),
    # and o_tile=256 gives a multi-step streamed vocab-projection grid.
    B, L, H, O, V = 8, 16, 128, 500, 512

    key = jax.random.PRNGKey(0)
    kp, k1, k2, k3 = jax.random.split(key, 4)

    params = _init_params(kp, V, H, O)
    prep = prepare_params(params, o_tile=256)   # one-time transpose / cast / pad

    input_single_seq = jax.random.randint(k1, (B, 1), 0, V, dtype=jnp.int32)   # [B, 1]
    last_hidden = 0.1 * jax.random.normal(k2, (1, B, H), jnp.float32)           # [1, B, H]
    encoder_output = 0.1 * jax.random.normal(k3, (B, L, H), jnp.float32)        # [B, L, H]
    enc_bf16 = encoder_output.astype(jnp.bfloat16)   # hoisted: cast once per sequence

    output, current_hidden = luong_attention_decoder_forward(
        input_single_seq, last_hidden, enc_bf16, prep)
    jax.block_until_ready((output, current_hidden))

    assert output.shape == (B, O)
    assert current_hidden.shape == (1, B, H)

    # Correctness vs pure-JAX f32 reference; loose tolerance since weights / activations
    # stream in bf16 (f32 accumulation) and logits round-trip in bf16.
    ref_out, ref_hid = _reference_forward(input_single_seq, last_hidden, encoder_output, params)
    assert bool(jnp.all(jnp.isfinite(output)))
    assert float(jnp.max(jnp.abs(output - ref_out))) < 1e-2
    assert float(jnp.max(jnp.abs(current_hidden - ref_hid))) < 1e-2

    print("KERNEL_OK")
</pallas_src>

<mosaic_0001>
module attributes {stable_mosaic.version = 11 : i64} {
  func.func @_state_kernel(%arg0: memref<8xi32, #tpu.memory_space<smem>>, %arg1: memref<512x128xf32, #tpu.memory_space<any>>, %arg2: memref<8x128xf32, #tpu.memory_space<vmem>>, %arg3: memref<8x16x128xbf16, #tpu.memory_space<vmem>>, %arg4: memref<128x384xbf16, #tpu.memory_space<vmem>>, %arg5: memref<128x384xbf16, #tpu.memory_space<vmem>>, %arg6: memref<1x384xf32, #tpu.memory_space<vmem>>, %arg7: memref<1x384xf32, #tpu.memory_space<vmem>>, %arg8: memref<128x128xbf16, #tpu.memory_space<vmem>>, %arg9: memref<128x128xbf16, #tpu.memory_space<vmem>>, %arg10: memref<1x128xf32, #tpu.memory_space<vmem>>, %arg11: memref<8x128xbf16, #tpu.memory_space<vmem>>, %arg12: memref<8x128xf32, #tpu.memory_space<vmem>>, %arg13: memref<8x128xf32, #tpu.memory_space<vmem>>, %arg14: memref<8x!tpu.dma_semaphore, #tpu.memory_space<semaphore_mem>>) attributes {dimension_semantics = [], scalar_prefetch = 0 : i64, scratch_operands = 2 : i64, tpu.core_type = #tpu.core_type<tc>} {
    %c0 = arith.constant 0 : index
    %0 = memref.load %arg0[%c0] : memref<8xi32, #tpu.memory_space<smem>>
    %c1 = arith.constant 1 : index
    %1 = memref.load %arg0[%c1] : memref<8xi32, #tpu.memory_space<smem>>
    %c2 = arith.constant 2 : index
    %2 = memref.load %arg0[%c2] : memref<8xi32, #tpu.memory_space<smem>>
    %c3 = arith.constant 3 : index
    %3 = memref.load %arg0[%c3] : memref<8xi32, #tpu.memory_space<smem>>
    %c4 = arith.constant 4 : index
    %4 = memref.load %arg0[%c4] : memref<8xi32, #tpu.memory_space<smem>>
    %c5 = arith.constant 5 : index
    %5 = memref.load %arg0[%c5] : memref<8xi32, #tpu.memory_space<smem>>
    %c6 = arith.constant 6 : index
    %6 = memref.load %arg0[%c6] : memref<8xi32, #tpu.memory_space<smem>>
    %c7 = arith.constant 7 : index
    %7 = memref.load %arg0[%c7] : memref<8xi32, #tpu.memory_space<smem>>
    %c0_i32 = arith.constant 0 : i32
    %c0_i32_0 = arith.constant 0 : i32
    %8 = tpu.memref_slice %arg1[%0, %c0_i32_0] : memref<512x128xf32, #tpu.memory_space<any>> -> memref<1x128xf32, #tpu.memory_space<any>>
    %c0_i32_1 = arith.constant 0 : i32
    %c0_i32_2 = arith.constant 0 : i32
    %9 = tpu.memref_slice %arg13[%c0_i32_1, %c0_i32_2] : memref<8x128xf32, #tpu.memory_space<vmem>> -> memref<1x128xf32, #tpu.memory_space<vmem>>
    %10 = tpu.memref_slice %arg14[%c0_i32] : memref<8x!tpu.dma_semaphore, #tpu.memory_space<semaphore_mem>> -> memref<1x!tpu.dma_semaphore, #tpu.memory_space<semaphore_mem>>
    %11 = tpu.memref_squeeze %10 : memref<1x!tpu.dma_semaphore, #tpu.memory_space<semaphore_mem>> -> memref<!tpu.dma_semaphore, #tpu.memory_space<semaphore_mem>>
    tpu.enqueue_dma source(%8 : memref<1x128xf32, #tpu.memory_space<any>>) target(%9 : memref<1x128xf32, #tpu.memory_space<vmem>>) target_semaphore(%11 : memref<!tpu.dma_semaphore, #tpu.memory_space<semaphore_mem>>)
    %c1_i32 = arith.constant 1 : i32
    %c0_i32_3 = arith.constant 0 : i32
    %12 = tpu.memref_slice %arg1[%1, %c0_i32_3] : memref<512x128xf32, #tpu.memory_space<any>> -> memref<1x128xf32, #tpu.memory_space<any>>
    %c1_i32_4 = arith.constant 1 : i32
    %c0_i32_5 = arith.constant 0 : i32
    %13 = tpu.memref_slice %arg13[%c1_i32_4, %c0_i32_5] : memref<8x128xf32, #tpu.memory_space<vmem>> -> memref<1x128xf32, #tpu.memory_space<vmem>>
    %14 = tpu.memref_slice %arg14[%c1_i32] : memref<8x!tpu.dma_semaphore, #tpu.memory_space<semaphore_mem>> -> memref<1x!tpu.dma_semaphore, #tpu.memory_space<semaphore_mem>>
    %15 = tpu.memref_squeeze %14 : memref<1x!tpu.dma_semaphore, #tpu.memory_space<semaphore_mem>> -> memref<!tpu.dma_semaphore, #tpu.memory_space<semaphore_mem>>
    tpu.enqueue_dma source(%12 : memref<1x128xf32, #tpu.memory_space<any>>) target(%13 : memref<1x128xf32, #tpu.memory_space<vmem>>) target_semaphore(%15 : memref<!tpu.dma_semaphore, #tpu.memory_space<semaphore_mem>>)
    %c2_i32 = arith.constant 2 : i32
    %c0_i32_6 = arith.constant 0 : i32
    %16 = tpu.memref_slice %arg1[%2, %c0_i32_6] : memref<512x128xf32, #tpu.memory_space<any>> -> memref<1x128xf32, #tpu.memory_space<any>>
    %c2_i32_7 = arith.constant 2 : i32
    %c0_i32_8 = arith.constant 0 : i32
    %17 = tpu.memref_slice %arg13[%c2_i32_7, %c0_i32_8] : memref<8x128xf32, #tpu.memory_space<vmem>> -> memref<1x128xf32, #tpu.memory_space<vmem>>
    %18 = tpu.memref_slice %arg14[%c2_i32] : memref<8x!tpu.dma_semaphore, #tpu.memory_space<semaphore_mem>> -> memref<1x!tpu.dma_semaphore, #tpu.memory_space<semaphore_mem>>
    %19 = tpu.memref_squeeze %18 : memref<1x!tpu.dma_semaphore, #tpu.memory_space<semaphore_mem>> -> memref<!tpu.dma_semaphore, #tpu.memory_space<semaphore_mem>>
    tpu.enqueue_dma source(%16 : memref<1x128xf32, #tpu.memory_space<any>>) target(%17 : memref<1x128xf32, #tpu.memory_space<vmem>>) target_semaphore(%19 : memref<!tpu.dma_semaphore, #tpu.memory_space<semaphore_mem>>)
    %c3_i32 = arith.constant 3 : i32
    %c0_i32_9 = arith.constant 0 : i32
    %20 = tpu.memref_slice %arg1[%3, %c0_i32_9] : memref<512x128xf32, #tpu.memory_space<any>> -> memref<1x128xf32, #tpu.memory_space<any>>
    %c3_i32_10 = arith.constant 3 : i32
    %c0_i32_11 = arith.constant 0 : i32
    %21 = tpu.memref_slice %arg13[%c3_i32_10, %c0_i32_11] : memref<8x128xf32, #tpu.memory_space<vmem>> -> memref<1x128xf32, #tpu.memory_space<vmem>>
    %22 = tpu.memref_slice %arg14[%c3_i32] : memref<8x!tpu.dma_semaphore, #tpu.memory_space<semaphore_mem>> -> memref<1x!tpu.dma_semaphore, #tpu.memory_space<semaphore_mem>>
    %23 = tpu.memref_squeeze %22 : memref<1x!tpu.dma_semaphore, #tpu.memory_space<semaphore_mem>> -> memref<!tpu.dma_semaphore, #tpu.memory_space<semaphore_mem>>
    tpu.enqueue_dma source(%20 : memref<1x128xf32, #tpu.memory_space<any>>) target(%21 : memref<1x128xf32, #tpu.memory_space<vmem>>) target_semaphore(%23 : memref<!tpu.dma_semaphore, #tpu.memory_space<semaphore_mem>>)
    %c4_i32 = arith.constant 4 : i32
    %c0_i32_12 = arith.constant 0 : i32
    %24 = tpu.memref_slice %arg1[%4, %c0_i32_12] : memref<512x128xf32, #tpu.memory_space<any>> -> memref<1x128xf32, #tpu.memory_space<any>>
    %c4_i32_13 = arith.constant 4 : i32
    %c0_i32_14 = arith.constant 0 : i32
    %25 = tpu.memref_slice %arg13[%c4_i32_13, %c0_i32_14] : memref<8x128xf32, #tpu.memory_space<vmem>> -> memref<1x128xf32, #tpu.memory_space<vmem>>
    %26 = tpu.memref_slice %arg14[%c4_i32] : memref<8x!tpu.dma_semaphore, #tpu.memory_space<semaphore_mem>> -> memref<1x!tpu.dma_semaphore, #tpu.memory_space<semaphore_mem>>
    %27 = tpu.memref_squeeze %26 : memref<1x!tpu.dma_semaphore, #tpu.memory_space<semaphore_mem>> -> memref<!tpu.dma_semaphore, #tpu.memory_space<semaphore_mem>>
    tpu.enqueue_dma source(%24 : memref<1x128xf32, #tpu.memory_space<any>>) target(%25 : memref<1x128xf32, #tpu.memory_space<vmem>>) target_semaphore(%27 : memref<!tpu.dma_semaphore, #tpu.memory_space<semaphore_mem>>)
    %c5_i32 = arith.constant 5 : i32
    %c0_i32_15 = arith.constant 0 : i32
    %28 = tpu.memref_slice %arg1[%5, %c0_i32_15] : memref<512x128xf32, #tpu.memory_space<any>> -> memref<1x128xf32, #tpu.memory_space<any>>
    %c5_i32_16 = arith.constant 5 : i32
    %c0_i32_17 = arith.constant 0 : i32
    %29 = tpu.memref_slice %arg13[%c5_i32_16, %c0_i32_17] : memref<8x128xf32, #tpu.memory_space<vmem>> -> memref<1x128xf32, #tpu.memory_space<vmem>>
    %30 = tpu.memref_slice %arg14[%c5_i32] : memref<8x!tpu.dma_semaphore, #tpu.memory_space<semaphore_mem>> -> memref<1x!tpu.dma_semaphore, #tpu.memory_space<semaphore_mem>>
    %31 = tpu.memref_squeeze %30 : memref<1x!tpu.dma_semaphore, #tpu.memory_space<semaphore_mem>> -> memref<!tpu.dma_semaphore, #tpu.memory_space<semaphore_mem>>
    tpu.enqueue_dma source(%28 : memref<1x128xf32, #tpu.memory_space<any>>) target(%29 : memref<1x128xf32, #tpu.memory_space<vmem>>) target_semaphore(%31 : memref<!tpu.dma_semaphore, #tpu.memory_space<semaphore_mem>>)
    %c6_i32 = arith.constant 6 : i32
    %c0_i32_18 = arith.constant 0 : i32
    %32 = tpu.memref_slice %arg1[%6, %c0_i32_18] : memref<512x128xf32, #tpu.memory_space<any>> -> memref<1x128xf32, #tpu.memory_space<any>>
    %c6_i32_19 = arith.constant 6 : i32
    %c0_i32_20 = arith.constant 0 : i32
    %33 = tpu.memref_slice %arg13[%c6_i32_19, %c0_i32_20] : memref<8x128xf32, #tpu.memory_space<vmem>> -> memref<1x128xf32, #tpu.memory_space<vmem>>
    %34 = tpu.memref_slice %arg14[%c6_i32] : memref<8x!tpu.dma_semaphore, #tpu.memory_space<semaphore_mem>> -> memref<1x!tpu.dma_semaphore, #tpu.memory_space<semaphore_mem>>
    %35 = tpu.memref_squeeze %34 : memref<1x!tpu.dma_semaphore, #tpu.memory_space<semaphore_mem>> -> memref<!tpu.dma_semaphore, #tpu.memory_space<semaphore_mem>>
    tpu.enqueue_dma source(%32 : memref<1x128xf32, #tpu.memory_space<any>>) target(%33 : memref<1x128xf32, #tpu.memory_space<vmem>>) target_semaphore(%35 : memref<!tpu.dma_semaphore, #tpu.memory_space<semaphore_mem>>)
    %c7_i32 = arith.constant 7 : i32
    %c0_i32_21 = arith.constant 0 : i32
    %36 = tpu.memref_slice %arg1[%7, %c0_i32_21] : memref<512x128xf32, #tpu.memory_space<any>> -> memref<1x128xf32, #tpu.memory_space<any>>
    %c7_i32_22 = arith.constant 7 : i32
    %c0_i32_23 = arith.constant 0 : i32
    %37 = tpu.memref_slice %arg13[%c7_i32_22, %c0_i32_23] : memref<8x128xf32, #tpu.memory_space<vmem>> -> memref<1x128xf32, #tpu.memory_space<vmem>>
    %38 = tpu.memref_slice %arg14[%c7_i32] : memref<8x!tpu.dma_semaphore, #tpu.memory_space<semaphore_mem>> -> memref<1x!tpu.dma_semaphore, #tpu.memory_space<semaphore_mem>>
    %39 = tpu.memref_squeeze %38 : memref<1x!tpu.dma_semaphore, #tpu.memory_space<semaphore_mem>> -> memref<!tpu.dma_semaphore, #tpu.memory_space<semaphore_mem>>
    tpu.enqueue_dma source(%36 : memref<1x128xf32, #tpu.memory_space<any>>) target(%37 : memref<1x128xf32, #tpu.memory_space<vmem>>) target_semaphore(%39 : memref<!tpu.dma_semaphore, #tpu.memory_space<semaphore_mem>>)
    %c0_24 = arith.constant 0 : index
    %c0_25 = arith.constant 0 : index
    %40 = vector.load %arg2[%c0_24, %c0_25] : memref<8x128xf32, #tpu.memory_space<vmem>>, vector<8x128xf32>
    %41 = arith.truncf %40 : vector<8x128xf32> to vector<8x128xbf16>
    %c0_26 = arith.constant 0 : index
    %c0_27 = arith.constant 0 : index
    %42 = vector.load %arg5[%c0_26, %c0_27] : memref<128x384xbf16, #tpu.memory_space<vmem>>, vector<128x384xbf16>
    %cst = arith.constant dense<0.000000e+00> : vector<8x384xf32>
    %43 = tpu.matmul %41, %42, %cst {dimension_numbers = #tpu.dot_dimension_numbers<[1], [0], [0], [1], [0, 0, 1, 1], [], []>} : vector<8x128xbf16>, vector<128x384xbf16>, vector<8x384xf32> -> vector<8x384xf32>
    %c0_28 = arith.constant 0 : index
    %c0_29 = arith.constant 0 : index
    %44 = vector.load %arg7[%c0_28, %c0_29] : memref<1x384xf32, #tpu.memory_space<vmem>>, vector<1x384xf32>
    %45 = vector.broadcast %44 : vector<1x384xf32> to vector<8x384xf32>
    %46 = arith.addf %43, %45 : vector<8x384xf32>
    %c0_i32_30 = arith.constant 0 : i32
    %c0_i32_31 = arith.constant 0 : i32
    %47 = tpu.memref_slice %arg1[%0, %c0_i32_31] : memref<512x128xf32, #tpu.memory_space<any>> -> memref<1x128xf32, #tpu.memory_space<any>>
    %c0_i32_32 = arith.constant 0 : i32
    %c0_i32_33 = arith.constant 0 : i32
    %48 = tpu.memref_slice %arg13[%c0_i32_32, %c0_i32_33] : memref<8x128xf32, #tpu.memory_space<vmem>> -> memref<1x128xf32, #tpu.memory_space<vmem>>
    %49 = tpu.memref_slice %arg14[%c0_i32_30] : memref<8x!tpu.dma_semaphore, #tpu.memory_space<semaphore_mem>> -> memref<1x!tpu.dma_semaphore, #tpu.memory_space<semaphore_mem>>
    %50 = tpu.memref_squeeze %49 : memref<1x!tpu.dma_semaphore, #tpu.memory_space<semaphore_mem>> -> memref<!tpu.dma_semaphore, #tpu.memory_space<semaphore_mem>>
    tpu.wait_dma2 semaphore(%50 : memref<!tpu.dma_semaphore, #tpu.memory_space<semaphore_mem>>) src(%47 : memref<1x128xf32, #tpu.memory_space<any>>) dst(%48 : memref<1x128xf32, #tpu.memory_space<vmem>>)
    %c1_i32_34 = arith.constant 1 : i32
    %c0_i32_35 = arith.constant 0 : i32
    %51 = tpu.memref_slice %arg1[%1, %c0_i32_35] : memref<512x128xf32, #tpu.memory_space<any>> -> memref<1x128xf32, #tpu.memory_space<any>>
    %c1_i32_36 = arith.constant 1 : i32
    %c0_i32_37 = arith.constant 0 : i32
    %52 = tpu.memref_slice %arg13[%c1_i32_36, %c0_i32_37] : memref<8x128xf32, #tpu.memory_space<vmem>> -> memref<1x128xf32, #tpu.memory_space<vmem>>
    %53 = tpu.memref_slice %arg14[%c1_i32_34] : memref<8x!tpu.dma_semaphore, #tpu.memory_space<semaphore_mem>> -> memref<1x!tpu.dma_semaphore, #tpu.memory_space<semaphore_mem>>
    %54 = tpu.memref_squeeze %53 : memref<1x!tpu.dma_semaphore, #tpu.memory_space<semaphore_mem>> -> memref<!tpu.dma_semaphore, #tpu.memory_space<semaphore_mem>>
    tpu.wait_dma2 semaphore(%54 : memref<!tpu.dma_semaphore, #tpu.memory_space<semaphore_mem>>) src(%51 : memref<1x128xf32, #tpu.memory_space<any>>) dst(%52 : memref<1x128xf32, #tpu.memory_space<vmem>>)
    %c2_i32_38 = arith.constant 2 : i32
    %c0_i32_39 = arith.constant 0 : i32
    %55 = tpu.memref_slice %arg1[%2, %c0_i32_39] : memref<512x128xf32, #tpu.memory_space<any>> -> memref<1x128xf32, #tpu.memory_space<any>>
    %c2_i32_40 = arith.constant 2 : i32
    %c0_i32_41 = arith.constant 0 : i32
    %56 = tpu.memref_slice %arg13[%c2_i32_40, %c0_i32_41] : memref<8x128xf32, #tpu.memory_space<vmem>> -> memref<1x128xf32, #tpu.memory_space<vmem>>
    %57 = tpu.memref_slice %arg14[%c2_i32_38] : memref<8x!tpu.dma_semaphore, #tpu.memory_space<semaphore_mem>> -> memref<1x!tpu.dma_semaphore, #tpu.memory_space<semaphore_mem>>
    %58 = tpu.memref_squeeze %57 : memref<1x!tpu.dma_semaphore, #tpu.memory_space<semaphore_mem>> -> memref<!tpu.dma_semaphore, #tpu.memory_space<semaphore_mem>>
    tpu.wait_dma2 semaphore(%58 : memref<!tpu.dma_semaphore, #tpu.memory_space<semaphore_mem>>) src(%55 : memref<1x128xf32, #tpu.memory_space<any>>) dst(%56 : memref<1x128xf32, #tpu.memory_space<vmem>>)
    %c3_i32_42 = arith.constant 3 : i32
    %c0_i32_43 = arith.constant 0 : i32
    %59 = tpu.memref_slice %arg1[%3, %c0_i32_43] : memref<512x128xf32, #tpu.memory_space<any>> -> memref<1x128xf32, #tpu.memory_space<any>>
    %c3_i32_44 = arith.constant 3 : i32
    %c0_i32_45 = arith.constant 0 : i32
    %60 = tpu.memref_slice %arg13[%c3_i32_44, %c0_i32_45] : memref<8x128xf32, #tpu.memory_space<vmem>> -> memref<1x128xf32, #tpu.memory_space<vmem>>
    %61 = tpu.memref_slice %arg14[%c3_i32_42] : memref<8x!tpu.dma_semaphore, #tpu.memory_space<semaphore_mem>> -> memref<1x!tpu.dma_semaphore, #tpu.memory_space<semaphore_mem>>
    %62 = tpu.memref_squeeze %61 : memref<1x!tpu.dma_semaphore, #tpu.memory_space<semaphore_mem>> -> memref<!tpu.dma_semaphore, #tpu.memory_space<semaphore_mem>>
    tpu.wait_dma2 semaphore(%62 : memref<!tpu.dma_semaphore, #tpu.memory_space<semaphore_mem>>) src(%59 : memref<1x128xf32, #tpu.memory_space<any>>) dst(%60 : memref<1x128xf32, #tpu.memory_space<vmem>>)
    %c4_i32_46 = arith.constant 4 : i32
    %c0_i32_47 = arith.constant 0 : i32
    %63 = tpu.memref_slice %arg1[%4, %c0_i32_47] : memref<512x128xf32, #tpu.memory_space<any>> -> memref<1x128xf32, #tpu.memory_space<any>>
    %c4_i32_48 = arith.constant 4 : i32
    %c0_i32_49 = arith.constant 0 : i32
    %64 = tpu.memref_slice %arg13[%c4_i32_48, %c0_i32_49] : memref<8x128xf32, #tpu.memory_space<vmem>> -> memref<1x128xf32, #tpu.memory_space<vmem>>
    %65 = tpu.memref_slice %arg14[%c4_i32_46] : memref<8x!tpu.dma_semaphore, #tpu.memory_space<semaphore_mem>> -> memref<1x!tpu.dma_semaphore, #tpu.memory_space<semaphore_mem>>
    %66 = tpu.memref_squeeze %65 : memref<1x!tpu.dma_semaphore, #tpu.memory_space<semaphore_mem>> -> memref<!tpu.dma_semaphore, #tpu.memory_space<semaphore_mem>>
    tpu.wait_dma2 semaphore(%66 : memref<!tpu.dma_semaphore, #tpu.memory_space<semaphore_mem>>) src(%63 : memref<1x128xf32, #tpu.memory_space<any>>) dst(%64 : memref<1x128xf32, #tpu.memory_space<vmem>>)
    %c5_i32_50 = arith.constant 5 : i32
    %c0_i32_51 = arith.constant 0 : i32
    %67 = tpu.memref_slice %arg1[%5, %c0_i32_51] : memref<512x128xf32, #tpu.memory_space<any>> -> memref<1x128xf32, #tpu.memory_space<any>>
    %c5_i32_52 = arith.constant 5 : i32
    %c0_i32_53 = arith.constant 0 : i32
    %68 = tpu.memref_slice %arg13[%c5_i32_52, %c0_i32_53] : memref<8x128xf32, #tpu.memory_space<vmem>> -> memref<1x128xf32, #tpu.memory_space<vmem>>
    %69 = tpu.memref_slice %arg14[%c5_i32_50] : memref<8x!tpu.dma_semaphore, #tpu.memory_space<semaphore_mem>> -> memref<1x!tpu.dma_semaphore, #tpu.memory_space<semaphore_mem>>
    %70 = tpu.memref_squeeze %69 : memref<1x!tpu.dma_semaphore, #tpu.memory_space<semaphore_mem>> -> memref<!tpu.dma_semaphore, #tpu.memory_space<semaphore_mem>>
    tpu.wait_dma2 semaphore(%70 : memref<!tpu.dma_semaphore, #tpu.memory_space<semaphore_mem>>) src(%67 : memref<1x128xf32, #tpu.memory_space<any>>) dst(%68 : memref<1x128xf32, #tpu.memory_space<vmem>>)
    %c6_i32_54 = arith.constant 6 : i32
    %c0_i32_55 = arith.constant 0 : i32
    %71 = tpu.memref_slice %arg1[%6, %c0_i32_55] : memref<512x128xf32, #tpu.memory_space<any>> -> memref<1x128xf32, #tpu.memory_space<any>>
    %c6_i32_56 = arith.constant 6 : i32
    %c0_i32_57 = arith.constant 0 : i32
    %72 = tpu.memref_slice %arg13[%c6_i32_56, %c0_i32_57] : memref<8x128xf32, #tpu.memory_space<vmem>> -> memref<1x128xf32, #tpu.memory_space<vmem>>
    %73 = tpu.memref_slice %arg14[%c6_i32_54] : memref<8x!tpu.dma_semaphore, #tpu.memory_space<semaphore_mem>> -> memref<1x!tpu.dma_semaphore, #tpu.memory_space<semaphore_mem>>
    %74 = tpu.memref_squeeze %73 : memref<1x!tpu.dma_semaphore, #tpu.memory_space<semaphore_mem>> -> memref<!tpu.dma_semaphore, #tpu.memory_space<semaphore_mem>>
    tpu.wait_dma2 semaphore(%74 : memref<!tpu.dma_semaphore, #tpu.memory_space<semaphore_mem>>) src(%71 : memref<1x128xf32, #tpu.memory_space<any>>) dst(%72 : memref<1x128xf32, #tpu.memory_space<vmem>>)
    %c7_i32_58 = arith.constant 7 : i32
    %c0_i32_59 = arith.constant 0 : i32
    %75 = tpu.memref_slice %arg1[%7, %c0_i32_59] : memref<512x128xf32, #tpu.memory_space<any>> -> memref<1x128xf32, #tpu.memory_space<any>>
    %c7_i32_60 = arith.constant 7 : i32
    %c0_i32_61 = arith.constant 0 : i32
    %76 = tpu.memref_slice %arg13[%c7_i32_60, %c0_i32_61] : memref<8x128xf32, #tpu.memory_space<vmem>> -> memref<1x128xf32, #tpu.memory_space<vmem>>
    %77 = tpu.memref_slice %arg14[%c7_i32_58] : memref<8x!tpu.dma_semaphore, #tpu.memory_space<semaphore_mem>> -> memref<1x!tpu.dma_semaphore, #tpu.memory_space<semaphore_mem>>
    %78 = tpu.memref_squeeze %77 : memref<1x!tpu.dma_semaphore, #tpu.memory_space<semaphore_mem>> -> memref<!tpu.dma_semaphore, #tpu.memory_space<semaphore_mem>>
    tpu.wait_dma2 semaphore(%78 : memref<!tpu.dma_semaphore, #tpu.memory_space<semaphore_mem>>) src(%75 : memref<1x128xf32, #tpu.memory_space<any>>) dst(%76 : memref<1x128xf32, #tpu.memory_space<vmem>>)
    %c0_62 = arith.constant 0 : index
    %c0_63 = arith.constant 0 : index
    %79 = vector.load %arg13[%c0_62, %c0_63] : memref<8x128xf32, #tpu.memory_space<vmem>>, vector<8x128xf32>
    %80 = arith.truncf %79 : vector<8x128xf32> to vector<8x128xbf16>
    %c0_64 = arith.constant 0 : index
    %c0_65 = arith.constant 0 : index
    %81 = vector.load %arg4[%c0_64, %c0_65] : memref<128x384xbf16, #tpu.memory_space<vmem>>, vector<128x384xbf16>
    %cst_66 = arith.constant dense<0.000000e+00> : vector<8x384xf32>
    %82 = tpu.matmul %80, %81, %cst_66 {dimension_numbers = #tpu.dot_dimension_numbers<[1], [0], [0], [1], [0, 0, 1, 1], [], []>} : vector<8x128xbf16>, vector<128x384xbf16>, vector<8x384xf32> -> vector<8x384xf32>
    %c0_67 = arith.constant 0 : index
    %c0_68 = arith.constant 0 : index
    %83 = vector.load %arg6[%c0_67, %c0_68] : memref<1x384xf32, #tpu.memory_space<vmem>>, vector<1x384xf32>
    %84 = vector.broadcast %83 : vector<1x384xf32> to vector<8x384xf32>
    %85 = arith.addf %82, %84 : vector<8x384xf32>
    %86 = vector.extract_strided_slice %85 {offsets = [0, 0], sizes = [8, 128], strides = [1, 1]} : vector<8x384xf32> to vector<8x128xf32>
    %87 = vector.extract_strided_slice %46 {offsets = [0, 0], sizes = [8, 128], strides = [1, 1]} : vector<8x384xf32> to vector<8x128xf32>
    %88 = arith.addf %86, %87 : vector<8x128xf32>
    %89 = arith.negf %88 : vector<8x128xf32>
    %90 = math.exp %89 : vector<8x128xf32>
    %cst_69 = arith.constant 1.000000e+00 : f32
    %91 = vector.broadcast %cst_69 : f32 to vector<8x128xf32>
    %92 = arith.addf %91, %90 : vector<8x128xf32>
    %93 = arith.divf %91, %92 : vector<8x128xf32>
    %94 = vector.extract_strided_slice %85 {offsets = [0, 128], sizes = [8, 128], strides = [1, 1]} : vector<8x384xf32> to vector<8x128xf32>
    %95 = vector.extract_strided_slice %46 {offsets = [0, 128], sizes = [8, 128], strides = [1, 1]} : vector<8x384xf32> to vector<8x128xf32>
    %96 = arith.addf %94, %95 : vector<8x128xf32>
    %97 = arith.negf %96 : vector<8x128xf32>
    %98 = math.exp %97 : vector<8x128xf32>
    %cst_70 = arith.constant 1.000000e+00 : f32
    %99 = vector.broadcast %cst_70 : f32 to vector<8x128xf32>
    %100 = arith.addf %99, %98 : vector<8x128xf32>
    %101 = arith.divf %99, %100 : vector<8x128xf32>
    %102 = vector.extract_strided_slice %85 {offsets = [0, 256], sizes = [8, 128], strides = [1, 1]} : vector<8x384xf32> to vector<8x128xf32>
    %103 = vector.extract_strided_slice %46 {offsets = [0, 256], sizes = [8, 128], strides = [1, 1]} : vector<8x384xf32> to vector<8x128xf32>
    %104 = arith.mulf %93, %103 : vector<8x128xf32>
    %105 = arith.addf %102, %104 : vector<8x128xf32>
    %106 = math.tanh %105 : vector<8x128xf32>
    %cst_71 = arith.constant 1.000000e+00 : f32
    %107 = vector.broadcast %cst_71 : f32 to vector<8x128xf32>
    %108 = arith.subf %107, %101 : vector<8x128xf32>
    %109 = arith.mulf %108, %106 : vector<8x128xf32>
    %110 = arith.mulf %101, %40 : vector<8x128xf32>
    %111 = arith.addf %109, %110 : vector<8x128xf32>
    %c0_72 = arith.constant 0 : index
    %c0_73 = arith.constant 0 : index
    %112 = vector.load %arg12[%c0_72, %c0_73] : memref<8x128xf32, #tpu.memory_space<vmem>>, vector<8x128xf32>
    tpu.vector_store %arg12[%c0_72, %c0_73], %111 {strides = array<i32>} : memref<8x128xf32, #tpu.memory_space<vmem>>, vector<8x128xf32>,
    %113 = arith.truncf %111 : vector<8x128xf32> to vector<8x128xbf16>
    %c0_74 = arith.constant 0 : index
    %c0_75 = arith.constant 0 : index
    %c0_76 = arith.constant 0 : index
    %114 = vector.load %arg3[%c0_74, %c0_75, %c0_76] : memref<8x16x128xbf16, #tpu.memory_space<vmem>>, vector<8x16x128xbf16>
    %115 = arith.extf %114 : vector<8x16x128xbf16> to vector<8x16x128xf32>
    %116 = vector.shape_cast %111 : vector<8x128xf32> to vector<8x1x128xf32>
    %117 = vector.broadcast %116 : vector<8x1x128xf32> to vector<8x16x128xf32>
    %118 = arith.mulf %115, %117 : vector<8x16x128xf32>
    %cst_77 = arith.constant dense<0.000000e+00> : vector<8x16xf32>
    %119 = vector.multi_reduction <add>, %118, %cst_77 [2] : vector<8x16x128xf32> to vector<8x16xf32>
    %cst_78 = arith.constant dense<0xFF800000> : vector<8xf32>
    %120 = vector.multi_reduction <maximumf>, %119, %cst_78 [1] : vector<8x16xf32> to vector<8xf32>
    %121 = vector.shape_cast %120 : vector<8xf32> to vector<8x1xf32>
    %122 = vector.broadcast %121 : vector<8x1xf32> to vector<8x16xf32>
    %123 = arith.subf %119, %122 : vector<8x16xf32>
    %124 = math.exp %123 : vector<8x16xf32>
    %cst_79 = arith.constant dense<0.000000e+00> : vector<8xf32>
    %125 = vector.multi_reduction <add>, %124, %cst_79 [1] : vector<8x16xf32> to vector<8xf32>
    %126 = vector.shape_cast %125 : vector<8xf32> to vector<8x1xf32>
    %127 = tpu.reciprocal %126 {approx = true} : vector<8x1xf32> -> vector<8x1xf32>
    %128 = vector.broadcast %127 : vector<8x1xf32> to vector<8x16xf32>
    %129 = arith.mulf %124, %128 : vector<8x16xf32>
    %130 = vector.shape_cast %129 : vector<8x16xf32> to vector<8x16x1xf32>
    %131 = vector.broadcast %130 : vector<8x16x1xf32> to vector<8x16x128xf32>
    %132 = arith.mulf %115, %131 : vector<8x16x128xf32>
    %cst_80 = arith.constant dense<0.000000e+00> : vector<8x128xf32>
    %133 = vector.multi_reduction <add>, %132, %cst_80 [1] : vector<8x16x128xf32> to vector<8x128xf32>
    %134 = arith.truncf %133 : vector<8x128xf32> to vector<8x128xbf16>
    %c0_81 = arith.constant 0 : index
    %c0_82 = arith.constant 0 : index
    %135 = vector.load %arg8[%c0_81, %c0_82] : memref<128x128xbf16, #tpu.memory_space<vmem>>, vector<128x128xbf16>
    %cst_83 = arith.constant dense<0.000000e+00> : vector<8x128xf32>
    %136 = tpu.matmul %134, %135, %cst_83 {dimension_numbers = #tpu.dot_dimension_numbers<[1], [0], [0], [1], [0, 0, 1, 1], [], []>} : vector<8x128xbf16>, vector<128x128xbf16>, vector<8x128xf32> -> vector<8x128xf32>
    %c0_84 = arith.constant 0 : index
    %c0_85 = arith.constant 0 : index
    %137 = vector.load %arg9[%c0_84, %c0_85] : memref<128x128xbf16, #tpu.memory_space<vmem>>, vector<128x128xbf16>
    %cst_86 = arith.constant dense<0.000000e+00> : vector<8x128xf32>
    %138 = tpu.matmul %113, %137, %cst_86 {dimension_numbers = #tpu.dot_dimension_numbers<[1], [0], [0], [1], [0, 0, 1, 1], [], []>} : vector<8x128xbf16>, vector<128x128xbf16>, vector<8x128xf32> -> vector<8x128xf32>
    %139 = arith.addf %136, %138 : vector<8x128xf32>
    %c0_87 = arith.constant 0 : index
    %c0_88 = arith.constant 0 : index
    %140 = vector.load %arg10[%c0_87, %c0_88] : memref<1x128xf32, #tpu.memory_space<vmem>>, vector<1x128xf32>
    %141 = vector.broadcast %140 : vector<1x128xf32> to vector<8x128xf32>
    %142 = arith.addf %139, %141 : vector<8x128xf32>
    %143 = math.tanh %142 : vector<8x128xf32>
    %144 = arith.truncf %143 : vector<8x128xf32> to vector<8x128xbf16>
    %c0_89 = arith.constant 0 : index
    %c0_90 = arith.constant 0 : index
    %145 = vector.load %arg11[%c0_89, %c0_90] : memref<8x128xbf16, #tpu.memory_space<vmem>>, vector<8x128xbf16>
    tpu.vector_store %arg11[%c0_89, %c0_90], %144 {strides = array<i32>} : memref<8x128xbf16, #tpu.memory_space<vmem>>, vector<8x128xbf16>,
    return
  }
}

</mosaic_0001>

<llo_original>
// kernel: tpu_custom_call.1
$region0: #{tpu_custom_call.1}
  #allocation0 [shape = 'u32[]', space=smem, size = 0x4, offset = 0x4, fixed_abs, tag = 'smem constant byte address 0x4 - core index']
  #allocation1 [shape = 'u32[72,128]{1,0:T(1,128)}', space=vmem, size = 0x9000, scoped, tag = 'internal scratch']
  #allocation2 [shape = 'f32[8,128]{1,0:T(8,128)}', space=vmem, size = 0x1000, scoped, tag = 'scratch operand']
  #allocation3 [shape = 's32[8]{0}', space=sflag, size = 0x20, scoped, tag = 'scratch operand']
  #allocation20 [shape = 's32[]', space=sflag, size = 0x4, offset = 0, fixed_abs, tag = 'sflag constant byte address 0x0 - dummy sync flag']
  #allocation21 [shape = 's32[]', space=sflag, size = 0x4, offset = 0, fixed_abs, tag = 'sflag constant byte address 0x0 - dummy sync flag']
  #allocation22 [shape = 'u32[]', space=smem, size = 0x4, offset = 0x44, fixed_abs, tag = 'smem constant byte address 0x44 - assertion arg 0']
  #allocation23 [shape = 'u32[]', space=smem, size = 0x4, offset = 0x48, fixed_abs, tag = 'smem constant byte address 0x48 - assertion arg 1']
  #allocation24 [shape = 's32[]', space=sflag, size = 0x4, offset = 0, fixed_abs, tag = 'sflag constant byte address 0x0 - dummy sync flag']
  #allocation25 [shape = 's32[]', space=sflag, size = 0x4, offset = 0, fixed_abs, tag = 'sflag constant byte address 0x0 - dummy sync flag']
  #allocation26 [shape = 's32[]', space=sflag, size = 0x4, offset = 0, fixed_abs, tag = 'sflag constant byte address 0x0 - dummy sync flag']
  #allocation27 [shape = 's32[]', space=sflag, size = 0x4, offset = 0, fixed_abs, tag = 'sflag constant byte address 0x0 - dummy sync flag']
  #allocation28 [shape = 's32[]', space=sflag, size = 0x4, offset = 0, fixed_abs, tag = 'sflag constant byte address 0x0 - dummy sync flag']
  #allocation29 [shape = 's32[]', space=sflag, size = 0x4, offset = 0, fixed_abs, tag = 'sflag constant byte address 0x0 - dummy sync flag']
  #allocation30 [shape = 's32[]', space=sflag, size = 0x4, offset = 0, fixed_abs, tag = 'sflag constant byte address 0x0 - dummy sync flag']
  #allocation31 [shape = 's32[]', space=sflag, size = 0x4, offset = 0, fixed_abs, tag = 'sflag constant byte address 0x0 - dummy sync flag']
  #allocation32 [shape = 's32[]', space=sflag, size = 0x4, offset = 0, fixed_abs, tag = 'sflag constant byte address 0x0 - dummy sync flag']
  #allocation33 [shape = 's32[]', space=sflag, size = 0x4, offset = 0, fixed_abs, tag = 'sflag constant byte address 0x0 - dummy sync flag']
  #allocation34 [shape = 's32[]', space=sflag, size = 0x4, offset = 0, fixed_abs, tag = 'sflag constant byte address 0x0 - dummy sync flag']
  #allocation35 [shape = 's32[]', space=sflag, size = 0x4, offset = 0, fixed_abs, tag = 'sflag constant byte address 0x0 - dummy sync flag']
  #allocation36 [shape = 's32[]', space=sflag, size = 0x4, offset = 0, fixed_abs, tag = 'sflag constant byte address 0x0 - dummy sync flag']
  #allocation37 [shape = 's32[]', space=sflag, size = 0x4, offset = 0, fixed_abs, tag = 'sflag constant byte address 0x0 - dummy sync flag']
  %s0 = inlined_call_operand.hbm [shape: s32[8], index: 0, kind: input, shape index: {}]
  %s1 = inlined_call_operand.hbm [shape: f32[512,128], index: 1, kind: input, shape index: {}]
  %s2 = inlined_call_operand.hbm [shape: f32[8,128], index: 2, kind: input, shape index: {}]
  %s3 = inlined_call_operand.hbm [shape: bf16[8,16,128], index: 3, kind: input, shape index: {}]
  %s4 = inlined_call_operand.hbm [shape: bf16[128,384], index: 4, kind: input, shape index: {}]
  %s5 = inlined_call_operand.hbm [shape: bf16[128,384], index: 5, kind: input, shape index: {}]
  %s6 = inlined_call_operand.vmem [shape: f32[1,384], index: 6, kind: input, shape index: {}]
  %s7 = inlined_call_operand.vmem [shape: f32[1,384], index: 7, kind: input, shape index: {}]
  %s8 = inlined_call_operand.hbm [shape: bf16[128,128], index: 8, kind: input, shape index: {}]
  %s9 = inlined_call_operand.hbm [shape: bf16[128,128], index: 9, kind: input, shape index: {}]
  %s10 = inlined_call_operand.vmem [shape: f32[1,128], index: 10, kind: input, shape index: {}]
  %s11 = inlined_call_operand.hbm [shape: bf16[8,128], index: 11, kind: output, shape index: {0}]
  %s12 = inlined_call_operand.hbm [shape: f32[8,128], index: 12, kind: output, shape index: {1}]
  %13 = xla_tuple %s11, %s12
  %s14 = sld [smem:[#allocation0]]
  $region118: #{tpu_custom_call.1} parent=0
    _
  %s16 = ssub.s32 1, %s14
  %s17 = scalar_select 0, %s16, %s14
  $region1: #{tpu_custom_call.1} parent=0
    #allocation4 [shape = 'u8[512]{0}', space=smem, size = 0x200, scoped, tag = 'input window, operand 0, single buffered']
    #allocation5 [shape = 's32[1]{0}', space=sflag, size = 0x4, scoped, tag = 'scoped memory for tpu_custom_call.1']
    #allocation6 [shape = 's32[1]{0}', space=sflag, size = 0x4, scoped, tag = 'scoped memory for tpu_custom_call.1']
    #allocation7 [shape = 's32[1]{0}', space=sflag, size = 0x4, scoped, tag = 'scoped memory for tpu_custom_call.1']
    #allocation8 [shape = 'u8[4096]{0}', space=vmem, size = 0x1000, scoped, tag = 'input window, operand 2, single buffered']
    #allocation9 [shape = 'u8[32768]{0}', space=vmem, size = 0x8000, scoped, tag = 'input window, operand 3, single buffered']
    #allocation10 [shape = 's32[1]{0}', space=sflag, size = 0x4, scoped, tag = 'scoped memory for tpu_custom_call.1']
    #allocation11 [shape = 'u8[98304]{0}', space=vmem, size = 0x18000, scoped, tag = 'input window, operand 4, single buffered']
    #allocation12 [shape = 'u8[98304]{0}', space=vmem, size = 0x18000, scoped, tag = 'input window, operand 5, single buffered']
    #allocation13 [shape = 's32[1]{0}', space=sflag, size = 0x4, scoped, tag = 'scoped memory for tpu_custom_call.1']
    #allocation14 [shape = 'u8[32768]{0}', space=vmem, size = 0x8000, scoped, tag = 'input window, operand 8, single buffered']
    #allocation15 [shape = 'u8[32768]{0}', space=vmem, size = 0x8000, scoped, tag = 'input window, operand 9, single buffered']
    #allocation16 [shape = 's32[1]{0}', space=sflag, size = 0x4, scoped, tag = 'scoped memory for tpu_custom_call.1']
    #allocation17 [shape = 'u8[2048]{0}', space=vmem, size = 0x800, scoped, tag = 'output window, operand 0, single buffered']
    #allocation18 [shape = 'u8[4096]{0}', space=vmem, size = 0x1000, scoped, tag = 'output window, operand 1, single buffered']
    #allocation19 [shape = 's32[1]{0}', space=sflag, size = 0x4, scoped, tag = 'scoped memory for tpu_custom_call.1']
    %18 = vsyncpa [#allocation7], 0
    %19 = vsyncpa [#allocation5], 0
    %20 = vsyncpa [#allocation10], 0
    %21 = vsyncpa [#allocation13], 0
    %22 = vsyncpa [#allocation16], 0
    %23 = vsyncpa [#allocation6], 0
    %24 = vsyncpa [#allocation19], 0
    // Predicated region
    $region2: #{tpu_custom_call.1} parent=1 // pred_check
      _
    $region3: #{tpu_custom_call.1} parent=1 // pred_check_branch
      %26 = sbr.rel (0) target = $region5
    $region4: #{tpu_custom_call.1} parent=1 // pred_region
      %28 = vsyncadd [#allocation7], 0
      %s30 = sshll.u32 %s0, 4
      %s31 = int_to_ptr.hbm [resolvable:$true] %s30
      %33 = dma.hbm_to_smem %s31, 16, [#allocation4], [#allocation7]
    $region5: #{tpu_custom_call.1} parent=1 // pred_fallthru
      _
    // Predicated region
    $region6: #{tpu_custom_call.1} parent=1 // pred_check
      _
    $region7: #{tpu_custom_call.1} parent=1 // pred_check_branch
      %35 = sbr.rel (0) target = $region9
    $region8: #{tpu_custom_call.1} parent=1 // pred_region
      %37 = vsyncadd [#allocation5], 0
      %s39 = sshll.u32 %s2, 4
      %s40 = int_to_ptr.hbm [resolvable:$true] %s39
      %s41 = sshll.u32 [#allocation8], 4
      %s42 = int_to_ptr.vmem [resolvable:$true] %s41
      %44 = dma.hbm_to_vmem [thread:$0]  %s40, 128, %s42, [#allocation5]
    $region9: #{tpu_custom_call.1} parent=1 // pred_fallthru
      _
    // Predicated region
    $region10: #{tpu_custom_call.1} parent=1 // pred_check
      _
    $region11: #{tpu_custom_call.1} parent=1 // pred_check_branch
      %46 = sbr.rel (0) target = $region13
    $region12: #{tpu_custom_call.1} parent=1 // pred_region
      %48 = vsyncadd [#allocation10], 0
      %s49 = sshll.u32 %s3, 4
      %s50 = int_to_ptr.hbm [resolvable:$true] %s49
      %s51 = sshll.u32 [#allocation9], 4
      %s52 = int_to_ptr.vmem [resolvable:$true] %s51
      %57 = dma.hbm_to_vmem [thread:$0]  %s50, 1024, %s52, [#allocation10], 64, 64, 4
    $region13: #{tpu_custom_call.1} parent=1 // pred_fallthru
      _
    // Predicated region
    $region14: #{tpu_custom_call.1} parent=1 // pred_check
      _
    $region15: #{tpu_custom_call.1} parent=1 // pred_check_branch
      %59 = sbr.rel (0) target = $region17
    $region16: #{tpu_custom_call.1} parent=1 // pred_region
      %61 = vsyncadd [#allocation10], 0
      %s62 = sshll.u32 %s4, 4
      %s63 = int_to_ptr.hbm [resolvable:$true] %s62
      %s64 = sshll.u32 [#allocation11], 4
      %s65 = int_to_ptr.vmem [resolvable:$true] %s64
      %70 = dma.hbm_to_vmem [thread:$0]  %s63, 3072, %s65, [#allocation10], 192, 192, 12
    $region17: #{tpu_custom_call.1} parent=1 // pred_fallthru
      _
    // Predicated region
    $region18: #{tpu_custom_call.1} parent=1 // pred_check
      _
    $region19: #{tpu_custom_call.1} parent=1 // pred_check_branch
      %72 = sbr.rel (0) target = $region21
    $region20: #{tpu_custom_call.1} parent=1 // pred_region
      %74 = vsyncadd [#allocation13], 0
      %s75 = sshll.u32 %s5, 4
      %s76 = int_to_ptr.hbm [resolvable:$true] %s75
      %s77 = sshll.u32 [#allocation12], 4
      %s78 = int_to_ptr.vmem [resolvable:$true] %s77
      %83 = dma.hbm_to_vmem [thread:$0]  %s76, 3072, %s78, [#allocation13], 192, 192, 12
    $region21: #{tpu_custom_call.1} parent=1 // pred_fallthru
      _
    // Predicated region
    $region22: #{tpu_custom_call.1} parent=1 // pred_check
      _
    $region23: #{tpu_custom_call.1} parent=1 // pred_check_branch
      %85 = sbr.rel (0) target = $region25
    $region24: #{tpu_custom_call.1} parent=1 // pred_region
      _
    $region25: #{tpu_custom_call.1} parent=1 // pred_fallthru
      _
    // Predicated region
    $region26: #{tpu_custom_call.1} parent=1 // pred_check
      _
    $region27: #{tpu_custom_call.1} parent=1 // pred_check_branch
      %87 = sbr.rel (0) target = $region29
    $region28: #{tpu_custom_call.1} parent=1 // pred_region
      _
    $region29: #{tpu_custom_call.1} parent=1 // pred_fallthru
      _
    // Predicated region
    $region30: #{tpu_custom_call.1} parent=1 // pred_check
      _
    $region31: #{tpu_custom_call.1} parent=1 // pred_check_branch
      %89 = sbr.rel (0) target = $region33
    $region32: #{tpu_custom_call.1} parent=1 // pred_region
      %91 = vsyncadd [#allocation13], 0
      %s92 = sshll.u32 %s8, 4
      %s93 = int_to_ptr.hbm [resolvable:$true] %s92
      %s94 = sshll.u32 [#allocation14], 4
      %s95 = int_to_ptr.vmem [resolvable:$true] %s94
      %100 = dma.hbm_to_vmem [thread:$0]  %s93, 1024, %s95, [#allocation13], 64, 64, 4
    $region33: #{tpu_custom_call.1} parent=1 // pred_fallthru
      _
    // Predicated region
    $region34: #{tpu_custom_call.1} parent=1 // pred_check
      _
    $region35: #{tpu_custom_call.1} parent=1 // pred_check_branch
      %102 = sbr.rel (0) target = $region37
    $region36: #{tpu_custom_call.1} parent=1 // pred_region
      %104 = vsyncadd [#allocation16], 0
      %s105 = sshll.u32 %s9, 4
      %s106 = int_to_ptr.hbm [resolvable:$true] %s105
      %s107 = sshll.u32 [#allocation15], 4
      %s108 = int_to_ptr.vmem [resolvable:$true] %s107
      %113 = dma.hbm_to_vmem [thread:$0]  %s106, 1024, %s108, [#allocation16], 64, 64, 4
    $region37: #{tpu_custom_call.1} parent=1 // pred_fallthru
      _
    // Predicated region
    $region38: #{tpu_custom_call.1} parent=1 // pred_check
      _
    $region39: #{tpu_custom_call.1} parent=1 // pred_check_branch
      %115 = sbr.rel (0) target = $region41
    $region40: #{tpu_custom_call.1} parent=1 // pred_region
      _
    $region41: #{tpu_custom_call.1} parent=1 // pred_fallthru
      _
    // Predicated region
    $region42: #{tpu_custom_call.1} parent=1 // pred_check
      _
    $region43: #{tpu_custom_call.1} parent=1 // pred_check_branch
      %117 = sbr.rel (0) target = $region45
    $region44: #{tpu_custom_call.1} parent=1 // pred_region
      %119 = dma.done [#allocation7], 16
    $region45: #{tpu_custom_call.1} parent=1 // pred_fallthru
      _
    // Predicated region
    $region46: #{tpu_custom_call.1} parent=1 // pred_check
      _
    $region47: #{tpu_custom_call.1} parent=1 // pred_check_branch
      %121 = sbr.rel (0) target = $region49
    $region48: #{tpu_custom_call.1} parent=1 // pred_region
      %123 = dma.done [#allocation5], 128
    $region49: #{tpu_custom_call.1} parent=1 // pred_fallthru
      _
    // Predicated region
    $region50: #{tpu_custom_call.1} parent=1 // pred_check
      _
    $region51: #{tpu_custom_call.1} parent=1 // pred_check_branch
      %125 = sbr.rel (0) target = $region53
    $region52: #{tpu_custom_call.1} parent=1 // pred_region
      %127 = dma.done [#allocation10], 1024
    $region53: #{tpu_custom_call.1} parent=1 // pred_fallthru
      _
    // Predicated region
    $region54: #{tpu_custom_call.1} parent=1 // pred_check
      _
    $region55: #{tpu_custom_call.1} parent=1 // pred_check_branch
      %129 = sbr.rel (0) target = $region57
    $region56: #{tpu_custom_call.1} parent=1 // pred_region
      %131 = dma.done [#allocation10], 3072
    $region57: #{tpu_custom_call.1} parent=1 // pred_fallthru
      _
    // Predicated region
    $region58: #{tpu_custom_call.1} parent=1 // pred_check
      _
    $region59: #{tpu_custom_call.1} parent=1 // pred_check_branch
      %133 = sbr.rel (0) target = $region61
    $region60: #{tpu_custom_call.1} parent=1 // pred_region
      %135 = dma.done [#allocation13], 3072
    $region61: #{tpu_custom_call.1} parent=1 // pred_fallthru
      _
    // Predicated region
    $region62: #{tpu_custom_call.1} parent=1 // pred_check
      _
    $region63: #{tpu_custom_call.1} parent=1 // pred_check_branch
      %137 = sbr.rel (0) target = $region65
    $region64: #{tpu_custom_call.1} parent=1 // pred_region
      %139 = dma.done [#allocation13], 1024
    $region65: #{tpu_custom_call.1} parent=1 // pred_fallthru
      _
    // Predicated region
    $region66: #{tpu_custom_call.1} parent=1 // pred_check
      _
    $region67: #{tpu_custom_call.1} parent=1 // pred_check_branch
      %141 = sbr.rel (0) target = $region69
    $region68: #{tpu_custom_call.1} parent=1 // pred_region
      %143 = dma.done [#allocation16], 1024
    $region69: #{tpu_custom_call.1} parent=1 // pred_fallthru
      _
    %144 = sfence
    %s145 = sld [smem:[#allocation4]]
    %s146 = sld [smem:[#allocation4 + $0x1]]
    %s147 = sld [smem:[#allocation4 + $0x2]]
    %s148 = sld [smem:[#allocation4 + $0x3]]
    %s149 = sld [smem:[#allocation4 + $0x4]]
    %s150 = sld [smem:[#allocation4 + $0x5]]
    %s151 = sld [smem:[#allocation4 + $0x6]]
    %s152 = sld [smem:[#allocation4 + $0x7]]
    %s153 = scalar_lea.hbm %s1, %s145
    // Predicated region
    $region70: #{tpu_custom_call.1} parent=1 // pred_check
      _
    $region71: #{tpu_custom_call.1} parent=1 // pred_check_branch
      %155 = sbr.rel target = $region73
    $region72: #{tpu_custom_call.1} parent=1 // pred_region
      %156 = sst [smem:[#allocation22]] [#allocation21]
      %157 = sst [smem:[#allocation23]] [#allocation20]
    $region73: #{tpu_custom_call.1} parent=1 // pred_fallthru
      _
    %159 = shalt.err (0)
    %s161 = sshll.u32 %s153, 4
    %s162 = int_to_ptr.hbm [resolvable:$true] %s161
    %s163 = sshll.u32 [#allocation2], 4
    %s164 = int_to_ptr.vmem [resolvable:$true] %s163
    %166 = dma.hbm_to_vmem [thread:$0]  %s162, 16, %s164, [#allocation3]
    %s167 = scalar_lea.hbm %s1, %s146
    %s168 = scalar_lea.vmem [#allocation2], 1
    %s169 = scalar_lea.sflag [#allocation3], 1
    // Predicated region
    $region74: #{tpu_custom_call.1} parent=1 // pred_check
      _
    $region75: #{tpu_custom_call.1} parent=1 // pred_check_branch
      %171 = sbr.rel target = $region77
    $region76: #{tpu_custom_call.1} parent=1 // pred_region
      %172 = sst [smem:[#allocation22]] [#allocation25]
      %173 = sst [smem:[#allocation23]] [#allocation24]
    $region77: #{tpu_custom_call.1} parent=1 // pred_fallthru
      _
    %175 = shalt.err (0)
    %s177 = sshll.u32 %s167, 4
    %s178 = int_to_ptr.hbm [resolvable:$true] %s177
    %s179 = sshll.u32 %s168, 4
    %s180 = int_to_ptr.vmem [resolvable:$true] %s179
    %182 = dma.hbm_to_vmem [thread:$0]  %s178, 16, %s180, %s169
    %s183 = scalar_lea.hbm %s1, %s147
    %s184 = scalar_lea.vmem [#allocation2], 2
    %s185 = scalar_lea.sflag [#allocation3], 2
    // Predicated region
    $region78: #{tpu_custom_call.1} parent=1 // pred_check
      _
    $region79: #{tpu_custom_call.1} parent=1 // pred_check_branch
      %187 = sbr.rel target = $region81
    $region80: #{tpu_custom_call.1} parent=1 // pred_region
      %188 = sst [smem:[#allocation22]] [#allocation27]
      %189 = sst [smem:[#allocation23]] [#allocation26]
    $region81: #{tpu_custom_call.1} parent=1 // pred_fallthru
      _
    %191 = shalt.err (0)
    %s193 = sshll.u32 %s183, 4
    %s194 = int_to_ptr.hbm [resolvable:$true] %s193
    %s195 = sshll.u32 %s184, 4
    %s196 = int_to_ptr.vmem [resolvable:$true] %s195
    %198 = dma.hbm_to_vmem [thread:$0]  %s194, 16, %s196, %s185
    %s199 = scalar_lea.hbm %s1, %s148
    %s200 = scalar_lea.vmem [#allocation2], 3
    %s201 = scalar_lea.sflag [#allocation3], 3
    // Predicated region
    $region82: #{tpu_custom_call.1} parent=1 // pred_check
      _
    $region83: #{tpu_custom_call.1} parent=1 // pred_check_branch
      %203 = sbr.rel target = $region85
    $region84: #{tpu_custom_call.1} parent=1 // pred_region
      %204 = sst [smem:[#allocation22]] [#allocation29]
      %205 = sst [smem:[#allocation23]] [#allocation28]
    $region85: #{tpu_custom_call.1} parent=1 // pred_fallthru
      _
    %207 = shalt.err (0)
    %s209 = sshll.u32 %s199, 4
    %s210 = int_to_ptr.hbm [resolvable:$true] %s209
    %s211 = sshll.u32 %s200, 4
    %s212 = int_to_ptr.vmem [resolvable:$true] %s211
    %214 = dma.hbm_to_vmem [thread:$0]  %s210, 16, %s212, %s201
    %s215 = scalar_lea.hbm %s1, %s149
    %s216 = scalar_lea.vmem [#allocation2], 4
    %s217 = scalar_lea.sflag [#allocation3], 4
    // Predicated region
    $region86: #{tpu_custom_call.1} parent=1 // pred_check
      _
    $region87: #{tpu_custom_call.1} parent=1 // pred_check_branch
      %219 = sbr.rel target = $region89
    $region88: #{tpu_custom_call.1} parent=1 // pred_region
      %220 = sst [smem:[#allocation22]] [#allocation31]
      %221 = sst [smem:[#allocation23]] [#allocation30]
    $region89: #{tpu_custom_call.1} parent=1 // pred_fallthru
      _
    %223 = shalt.err (0)
    %s225 = sshll.u32 %s215, 4
    %s226 = int_to_ptr.hbm [resolvable:$true] %s225
    %s227 = sshll.u32 %s216, 4
    %s228 = int_to_ptr.vmem [resolvable:$true] %s227
    %230 = dma.hbm_to_vmem [thread:$0]  %s226, 16, %s228, %s217
    %s231 = scalar_lea.hbm %s1, %s150
    %s232 = scalar_lea.vmem [#allocation2], 5
    %s233 = scalar_lea.sflag [#allocation3], 5
    // Predicated region
    $region90: #{tpu_custom_call.1} parent=1 // pred_check
      _
    $region91: #{tpu_custom_call.1} parent=1 // pred_check_branch
      %235 = sbr.rel target = $region93
    $region92: #{tpu_custom_call.1} parent=1 // pred_region
      %236 = sst [smem:[#allocation22]] [#allocation33]
      %237 = sst [smem:[#allocation23]] [#allocation32]
    $region93: #{tpu_custom_call.1} parent=1 // pred_fallthru
      _
    %239 = shalt.err (0)
    %s241 = sshll.u32 %s231, 4
    %s242 = int_to_ptr.hbm [resolvable:$true] %s241
    %s243 = sshll.u32 %s232, 4
    %s244 = int_to_ptr.vmem [resolvable:$true] %s243
    %246 = dma.hbm_to_vmem [thread:$0]  %s242, 16, %s244, %s233
    %s247 = scalar_lea.hbm %s1, %s151
    %s248 = scalar_lea.vmem [#allocation2], 6
    %s249 = scalar_lea.sflag [#allocation3], 6
    // Predicated region
    $region94: #{tpu_custom_call.1} parent=1 // pred_check
      _
    $region95: #{tpu_custom_call.1} parent=1 // pred_check_branch
      %251 = sbr.rel target = $region97
    $region96: #{tpu_custom_call.1} parent=1 // pred_region
      %252 = sst [smem:[#allocation22]] [#allocation35]
      %253 = sst [smem:[#allocation23]] [#allocation34]
    $region97: #{tpu_custom_call.1} parent=1 // pred_fallthru
      _
    %255 = shalt.err (0)
    %s257 = sshll.u32 %s247, 4
    %s258 = int_to_ptr.hbm [resolvable:$true] %s257
    %s259 = sshll.u32 %s248, 4
    %s260 = int_to_ptr.vmem [resolvable:$true] %s259
    %262 = dma.hbm_to_vmem [thread:$0]  %s258, 16, %s260, %s249
    %s263 = scalar_lea.hbm %s1, %s152
    %s264 = scalar_lea.vmem [#allocation2], 7
    %s265 = scalar_lea.sflag [#allocation3], 7
    // Predicated region
    $region98: #{tpu_custom_call.1} parent=1 // pred_check
      _
    $region99: #{tpu_custom_call.1} parent=1 // pred_check_branch
      %267 = sbr.rel target = $region101
    $region100: #{tpu_custom_call.1} parent=1 // pred_region
      %268 = sst [smem:[#allocation22]] [#allocation37]
      %269 = sst [smem:[#allocation23]] [#allocation36]
    $region101: #{tpu_custom_call.1} parent=1 // pred_fallthru
      _
    %271 = shalt.err (0)
    %s273 = sshll.u32 %s263, 4
    %s274 = int_to_ptr.hbm [resolvable:$true] %s273
    %s275 = sshll.u32 %s264, 4
    %s276 = int_to_ptr.vmem [resolvable:$true] %s275
    %278 = dma.hbm_to_vmem [thread:$0]  %s274, 16, %s276, %s265
    %v279 = vld [vmem:[#allocation8] sm:$0xff]
    %v280 = vpack.c.bf16 %v279, %v279
    %v281 = vld [vmem:[#allocation12] sm:$0xff]
    %v282 = vld [vmem:[#allocation12 + $0x8] sm:$0xf]
    %v283 = vld [vmem:[#allocation12 + $0xc] sm:$0xff]
    %v284 = vld [vmem:[#allocation12 + $0x14] sm:$0xf]
    %v285 = vld [vmem:[#allocation12 + $0x18] sm:$0xff]
    %v286 = vld [vmem:[#allocation12 + $0x20] sm:$0xf]
    %v287 = vld [vmem:[#allocation12 + $0x24] sm:$0xff]
    %v288 = vld [vmem:[#allocation12 + $0x2c] sm:$0xf]
    %v289 = vld [vmem:[#allocation12 + $0x30] sm:$0xff]
    %v290 = vld [vmem:[#allocation12 + $0x38] sm:$0xf]
    %v291 = vld [vmem:[#allocation12 + $0x3c] sm:$0xff]
    %v292 = vld [vmem:[#allocation12 + $0x44] sm:$0xf]
    %v293 = vld [vmem:[#allocation12 + $0x48] sm:$0xff]
    %v294 = vld [vmem:[#allocation12 + $0x50] sm:$0xf]
    %v295 = vld [vmem:[#allocation12 + $0x54] sm:$0xff]
    %v296 = vld [vmem:[#allocation12 + $0x5c] sm:$0xf]
    %v297 = vld [vmem:[#allocation12 + $0x60] sm:$0xff]
    %v298 = vld [vmem:[#allocation12 + $0x68] sm:$0xf]
    %v299 = vld [vmem:[#allocation12 + $0x6c] sm:$0xff]
    %v300 = vld [vmem:[#allocation12 + $0x74] sm:$0xf]
    %v301 = vld [vmem:[#allocation12 + $0x78] sm:$0xff]
    %v302 = vld [vmem:[#allocation12 + $0x80] sm:$0xf]
    %v303 = vld [vmem:[#allocation12 + $0x84] sm:$0xff]
    %v304 = vld [vmem:[#allocation12 + $0x8c] sm:$0xf]
    %v305 = vld [vmem:[#allocation12 + $0x90] sm:$0xff]
    %v306 = vld [vmem:[#allocation12 + $0x98] sm:$0xf]
    %v307 = vld [vmem:[#allocation12 + $0x9c] sm:$0xff]
    %v308 = vld [vmem:[#allocation12 + $0xa4] sm:$0xf]
    %v309 = vld [vmem:[#allocation12 + $0xa8] sm:$0xff]
    %v310 = vld [vmem:[#allocation12 + $0xb0] sm:$0xf]
    %v311 = vld [vmem:[#allocation12 + $0xb4] sm:$0xff]
    %v312 = vld [vmem:[#allocation12 + $0xbc] sm:$0xf]
    %v313 = vld [vmem:[%s7] sm:$0x7]
    %v315 = vperm.slane %v313, 0
    %v316 = vperm.slane %v313, 1
    %v317 = vperm.slane %v313, 2
    %v353 = vunpack.c.l.b16 %v281
    %v354 = vunpack.c.h.b16 %v281
    %v355 = vunpack.c.l.b16 %v282
    %v356 = vunpack.c.l.b16 %v283
    %v357 = vunpack.c.h.b16 %v283
    %v358 = vunpack.c.l.b16 %v284
    %v359 = vunpack.c.l.b16 %v285
    %v360 = vunpack.c.h.b16 %v285
    %v361 = vunpack.c.l.b16 %v286
    %v362 = vunpack.c.l.b16 %v287
    %v363 = vunpack.c.h.b16 %v287
    %v364 = vunpack.c.l.b16 %v288
    %v365 = vunpack.c.l.b16 %v289
    %v366 = vunpack.c.h.b16 %v289
    %v367 = vunpack.c.l.b16 %v290
    %v368 = vunpack.c.l.b16 %v291
    %v369 = vunpack.c.h.b16 %v291
    %v370 = vunpack.c.l.b16 %v292
    %v371 = vunpack.c.l.b16 %v293
    %v372 = vunpack.c.h.b16 %v293
    %v373 = vunpack.c.l.b16 %v294
    %v374 = vunpack.c.l.b16 %v295
    %v375 = vunpack.c.h.b16 %v295
    %v376 = vunpack.c.l.b16 %v296
    %v377 = vunpack.c.l.b16 %v297
    %v378 = vunpack.c.h.b16 %v297
    %v379 = vunpack.c.l.b16 %v298
    %v380 = vunpack.c.l.b16 %v299
    %v381 = vunpack.c.h.b16 %v299
    %v382 = vunpack.c.l.b16 %v300
    %v383 = vunpack.c.l.b16 %v301
    %v384 = vunpack.c.h.b16 %v301
    %v385 = vunpack.c.l.b16 %v302
    %v386 = vunpack.c.l.b16 %v303
    %v387 = vunpack.c.h.b16 %v303
    %v388 = vunpack.c.l.b16 %v304
    %v389 = vunpack.c.l.b16 %v305
    %v390 = vunpack.c.h.b16 %v305
    %v391 = vunpack.c.l.b16 %v306
    %v392 = vunpack.c.l.b16 %v307
    %v393 = vunpack.c.h.b16 %v307
    %v394 = vunpack.c.l.b16 %v308
    %v395 = vunpack.c.l.b16 %v309
    %v396 = vunpack.c.h.b16 %v309
    %v397 = vunpack.c.l.b16 %v310
    %v398 = vunpack.c.l.b16 %v311
    %v399 = vunpack.c.h.b16 %v311
    %v400 = vunpack.c.l.b16 %v312
    %v401 = vpack.c.b16 %v356, %v353
    %v402 = vpack.c.b16 %v357, %v354
    %v403 = vpack.c.b16 %v358, %v355
    %v404 = vpack.c.b16 %v362, %v359
    %v405 = vpack.c.b16 %v363, %v360
    %v406 = vpack.c.b16 %v364, %v361
    %v407 = vpack.c.b16 %v368, %v365
    %v408 = vpack.c.b16 %v369, %v366
    %v409 = vpack.c.b16 %v370, %v367
    %v410 = vpack.c.b16 %v374, %v371
    %v411 = vpack.c.b16 %v375, %v372
    %v412 = vpack.c.b16 %v376, %v373
    %v413 = vpack.c.b16 %v380, %v377
    %v414 = vpack.c.b16 %v381, %v378
    %v415 = vpack.c.b16 %v382, %v379
    %v416 = vpack.c.b16 %v386, %v383
    %v417 = vpack.c.b16 %v387, %v384
    %v418 = vpack.c.b16 %v388, %v385
    %v419 = vpack.c.b16 %v392, %v389
    %v420 = vpack.c.b16 %v393, %v390
    %v421 = vpack.c.b16 %v394, %v391
    %v422 = vpack.c.b16 %v398, %v395
    %v423 = vpack.c.b16 %v399, %v396
    %v424 = vpack.c.b16 %v400, %v397
    %449 = vmatpush.bf16.msra.mxu0 %v422
    %450 = vmatpush.bf16.msra.mxu0 %v419
    %451 = vmatpush.bf16.msra.mxu0 %v416
    %452 = vmatpush.bf16.msra.mxu0 %v413
    %453 = vmatpush.bf16.msra.mxu0 %v410
    %454 = vmatpush.bf16.msra.mxu0 %v407
    %455 = vmatpush.bf16.msra.mxu0 %v404
    %456 = vmatpush.bf16.msra.mxu0 %v401
    %457 = vmatmul.bf16.gmra.mxu0 %v280
    %v458 = vpop.f32.mrf.mxu0
    %v459 = vadd.f32 %v315, %v458
    %v460 = vpop.f32.mrf.mxu0
    %461 = vdwg.mxu0
    %462 = vmatpush.bf16.msra.mxu0 %v423
    %463 = vmatpush.bf16.msra.mxu0 %v420
    %464 = vmatpush.bf16.msra.mxu0 %v417
    %465 = vmatpush.bf16.msra.mxu0 %v414
    %466 = vmatpush.bf16.msra.mxu0 %v411
    %467 = vmatpush.bf16.msra.mxu0 %v408
    %468 = vmatpush.bf16.msra.mxu0 %v405
    %469 = vmatpush.bf16.msra.mxu0 %v402
    %470 = vmatmul.bf16.gmra.mxu0 %v280
    %v471 = vpop.f32.mrf.mxu0
    %v472 = vadd.f32 %v316, %v471
    %v473 = vpop.f32.mrf.mxu0
    %474 = vdwg.mxu0
    %475 = vmatpush.bf16.msra.mxu0 %v424
    %476 = vmatpush.bf16.msra.mxu0 %v421
    %477 = vmatpush.bf16.msra.mxu0 %v418
    %478 = vmatpush.bf16.msra.mxu0 %v415
    %479 = vmatpush.bf16.msra.mxu0 %v412
    %480 = vmatpush.bf16.msra.mxu0 %v409
    %481 = vmatpush.bf16.msra.mxu0 %v406
    %482 = vmatpush.bf16.msra.mxu0 %v403
    %483 = vmatmul.bf16.gmra.mxu0 %v280
    %v484 = vpop.f32.mrf.mxu0
    %v485 = vadd.f32 %v317, %v484
    %v486 = vpop.f32.mrf.mxu0
    %487 = vdwg.mxu0
    %s488 = smul.u32 1, 1
    %s489 = sshll.u32 %s488, 4
    %490 = dma.done [#allocation3], %s489
    %s491 = sshll.u32 %s488, 4
    %492 = dma.done %s169, %s491
    %s493 = sshll.u32 %s488, 4
    %494 = dma.done %s185, %s493
    %s495 = sshll.u32 %s488, 4
    %496 = dma.done %s201, %s495
    %s497 = sshll.u32 %s488, 4
    %498 = dma.done %s217, %s497
    %s499 = sshll.u32 %s488, 4
    %500 = dma.done %s233, %s499
    %s501 = sshll.u32 %s488, 4
    %502 = dma.done %s249, %s501
    %s503 = sshll.u32 %s488, 4
    %504 = dma.done %s265, %s503
    %v505 = vld [vmem:[#allocation2] sm:$0xff]
    %v506 = vpack.c.bf16 %v505, %v505
    %v507 = vld [vmem:[#allocation11] sm:$0xff]
    %v508 = vld [vmem:[#allocation11 + $0x8] sm:$0xf]
    %v509 = vld [vmem:[#allocation11 + $0xc] sm:$0xff]
    %v510 = vld [vmem:[#allocation11 + $0x14] sm:$0xf]
    %v511 = vld [vmem:[#allocation11 + $0x18] sm:$0xff]
    %v512 = vld [vmem:[#allocation11 + $0x20] sm:$0xf]
    %v513 = vld [vmem:[#allocation11 + $0x24] sm:$0xff]
    %v514 = vld [vmem:[#allocation11 + $0x2c] sm:$0xf]
    %v515 = vld [vmem:[#allocation11 + $0x30] sm:$0xff]
    %v516 = vld [vmem:[#allocation11 + $0x38] sm:$0xf]
    %v517 = vld [vmem:[#allocation11 + $0x3c] sm:$0xff]
    %v518 = vld [vmem:[#allocation11 + $0x44] sm:$0xf]
    %v519 = vld [vmem:[#allocation11 + $0x48] sm:$0xff]
    %v520 = vld [vmem:[#allocation11 + $0x50] sm:$0xf]
    %v521 = vld [vmem:[#allocation11 + $0x54] sm:$0xff]
    %v522 = vld [vmem:[#allocation11 + $0x5c] sm:$0xf]
    %v523 = vld [vmem:[#allocation11 + $0x60] sm:$0xff]
    %v524 = vld [vmem:[#allocation11 + $0x68] sm:$0xf]
    %v525 = vld [vmem:[#allocation11 + $0x6c] sm:$0xff]
    %v526 = vld [vmem:[#allocation11 + $0x74] sm:$0xf]
    %v527 = vld [vmem:[#allocation11 + $0x78] sm:$0xff]
    %v528 = vld [vmem:[#allocation11 + $0x80] sm:$0xf]
    %v529 = vld [vmem:[#allocation11 + $0x84] sm:$0xff]
    %v530 = vld [vmem:[#allocation11 + $0x8c] sm:$0xf]
    %v531 = vld [vmem:[#allocation11 + $0x90] sm:$0xff]
    %v532 = vld [vmem:[#allocation11 + $0x98] sm:$0xf]
    %v533 = vld [vmem:[#allocation11 + $0x9c] sm:$0xff]
    %v534 = vld [vmem:[#allocation11 + $0xa4] sm:$0xf]
    %v535 = vld [vmem:[#allocation11 + $0xa8] sm:$0xff]
    %v536 = vld [vmem:[#allocation11 + $0xb0] sm:$0xf]
    %v537 = vld [vmem:[#allocation11 + $0xb4] sm:$0xff]
    %v538 = vld [vmem:[#allocation11 + $0xbc] sm:$0xf]
    %v539 = vld [vmem:[%s6] sm:$0x7]
    %v541 = vperm.slane %v539, 0
    %v542 = vperm.slane %v539, 1
    %v543 = vperm.slane %v539, 2
    %v579 = vunpack.c.l.b16 %v507
    %v580 = vunpack.c.h.b16 %v507
    %v581 = vunpack.c.l.b16 %v508
    %v582 = vunpack.c.l.b16 %v509
    %v583 = vunpack.c.h.b16 %v509
    %v584 = vunpack.c.l.b16 %v510
    %v585 = vunpack.c.l.b16 %v511
    %v586 = vunpack.c.h.b16 %v511
    %v587 = vunpack.c.l.b16 %v512
    %v588 = vunpack.c.l.b16 %v513
    %v589 = vunpack.c.h.b16 %v513
    %v590 = vunpack.c.l.b16 %v514
    %v591 = vunpack.c.l.b16 %v515
    %v592 = vunpack.c.h.b16 %v515
    %v593 = vunpack.c.l.b16 %v516
    %v594 = vunpack.c.l.b16 %v517
    %v595 = vunpack.c.h.b16 %v517
    %v596 = vunpack.c.l.b16 %v518
    %v597 = vunpack.c.l.b16 %v519
    %v598 = vunpack.c.h.b16 %v519
    %v599 = vunpack.c.l.b16 %v520
    %v600 = vunpack.c.l.b16 %v521
    %v601 = vunpack.c.h.b16 %v521
    %v602 = vunpack.c.l.b16 %v522
    %v603 = vunpack.c.l.b16 %v523
    %v604 = vunpack.c.h.b16 %v523
    %v605 = vunpack.c.l.b16 %v524
    %v606 = vunpack.c.l.b16 %v525
    %v607 = vunpack.c.h.b16 %v525
    %v608 = vunpack.c.l.b16 %v526
    %v609 = vunpack.c.l.b16 %v527
    %v610 = vunpack.c.h.b16 %v527
    %v611 = vunpack.c.l.b16 %v528
    %v612 = vunpack.c.l.b16 %v529
    %v613 = vunpack.c.h.b16 %v529
    %v614 = vunpack.c.l.b16 %v530
    %v615 = vunpack.c.l.b16 %v531
    %v616 = vunpack.c.h.b16 %v531
    %v617 = vunpack.c.l.b16 %v532
    %v618 = vunpack.c.l.b16 %v533
    %v619 = vunpack.c.h.b16 %v533
    %v620 = vunpack.c.l.b16 %v534
    %v621 = vunpack.c.l.b16 %v535
    %v622 = vunpack.c.h.b16 %v535
    %v623 = vunpack.c.l.b16 %v536
    %v624 = vunpack.c.l.b16 %v537
    %v625 = vunpack.c.h.b16 %v537
    %v626 = vunpack.c.l.b16 %v538
    %v627 = vpack.c.b16 %v582, %v579
    %v628 = vpack.c.b16 %v583, %v580
    %v629 = vpack.c.b16 %v584, %v581
    %v630 = vpack.c.b16 %v588, %v585
    %v631 = vpack.c.b16 %v589, %v586
    %v632 = vpack.c.b16 %v590, %v587
    %v633 = vpack.c.b16 %v594, %v591
    %v634 = vpack.c.b16 %v595, %v592
    %v635 = vpack.c.b16 %v596, %v593
    %v636 = vpack.c.b16 %v600, %v597
    %v637 = vpack.c.b16 %v601, %v598
    %v638 = vpack.c.b16 %v602, %v599
    %v639 = vpack.c.b16 %v606, %v603
    %v640 = vpack.c.b16 %v607, %v604
    %v641 = vpack.c.b16 %v608, %v605
    %v642 = vpack.c.b16 %v612, %v609
    %v643 = vpack.c.b16 %v613, %v610
    %v644 = vpack.c.b16 %v614, %v611
    %v645 = vpack.c.b16 %v618, %v615
    %v646 = vpack.c.b16 %v619, %v616
    %v647 = vpack.c.b16 %v620, %v617
    %v648 = vpack.c.b16 %v624, %v621
    %v649 = vpack.c.b16 %v625, %v622
    %v650 = vpack.c.b16 %v626, %v623
    %675 = vmatpush.bf16.msra.mxu0 %v648
    %676 = vmatpush.bf16.msra.mxu0 %v645
    %677 = vmatpush.bf16.msra.mxu0 %v642
    %678 = vmatpush.bf16.msra.mxu0 %v639
    %679 = vmatpush.bf16.msra.mxu0 %v636
    %680 = vmatpush.bf16.msra.mxu0 %v633
    %681 = vmatpush.bf16.msra.mxu0 %v630
    %682 = vmatpush.bf16.msra.mxu0 %v627
    %683 = vmatmul.bf16.gmra.mxu0 %v506
    %v684 = vpop.f32.mrf.mxu0
    %v685 = vadd.f32 %v541, %v684
    %v686 = vpop.f32.mrf.mxu0
    %687 = vdwg.mxu0
    %688 = vmatpush.bf16.msra.mxu0 %v649
    %689 = vmatpush.bf16.msra.mxu0 %v646
    %690 = vmatpush.bf16.msra.mxu0 %v643
    %691 = vmatpush.bf16.msra.mxu0 %v640
    %692 = vmatpush.bf16.msra.mxu0 %v637
    %693 = vmatpush.bf16.msra.mxu0 %v634
    %694 = vmatpush.bf16.msra.mxu0 %v631
    %695 = vmatpush.bf16.msra.mxu0 %v628
    %696 = vmatmul.bf16.gmra.mxu0 %v506
    %v697 = vpop.f32.mrf.mxu0
    %v698 = vadd.f32 %v542, %v697
    %v699 = vpop.f32.mrf.mxu0
    %700 = vdwg.mxu0
    %701 = vmatpush.bf16.msra.mxu0 %v650
    %702 = vmatpush.bf16.msra.mxu0 %v647
    %703 = vmatpush.bf16.msra.mxu0 %v644
    %704 = vmatpush.bf16.msra.mxu0 %v641
    %705 = vmatpush.bf16.msra.mxu0 %v638
    %706 = vmatpush.bf16.msra.mxu0 %v635
    %707 = vmatpush.bf16.msra.mxu0 %v632
    %708 = vmatpush.bf16.msra.mxu0 %v629
    %709 = vmatmul.bf16.gmra.mxu0 %v506
    %v710 = vpop.f32.mrf.mxu0
    %v711 = vadd.f32 %v543, %v710
    %v712 = vpop.f32.mrf.mxu0
    %713 = vdwg.mxu0
    %v714 = vadd.f32 %v685, %v459
    %v715 = vxor.u32 %v714, 2147483648
    %v716 = vmul.f32 %v715, 1.442695
    %v717 = vpow.pop %v716
    %v718 = vadd.f32 %v717, 1.0
    %v719 = vrcp.pop %v718
    %v720 = vmul.f32 %v718, %v719
    %v721 = vsub.f32 1.0, %v720
    %v722 = vmul.f32 %v719, %v721
    %v723 = vadd.f32 %v719, %v722
    %vm724 = vweird.f32 %v718
    %vm725 = vweird.f32 %v719
    %vm726 = vmor %vm724, %vm725
    %v727 = vsel %vm726, %v719, %v723
    %v728 = vand.u32 2147483647, %v718
    %vm729 = vcmp.eq.f32.partialorder %v728, 8.507059e+37
    %v730 = vand.u32 %v718, 2147483648
    %v731 = vor.u32 1.1754944e-38, %v730
    %v732 = vsel %vm729, %v731, %v727
    %v733 = vmul.f32 1.0, %v732
    %v734 = vadd.f32 %v698, %v472
    %v735 = vxor.u32 %v734, 2147483648
    %v736 = vmul.f32 %v735, 1.442695
    %v737 = vpow.pop %v736
    %v738 = vadd.f32 %v737, 1.0
    %v739 = vrcp.pop %v738
    %v740 = vmul.f32 %v738, %v739
    %v741 = vsub.f32 1.0, %v740
    %v742 = vmul.f32 %v739, %v741
    %v743 = vadd.f32 %v739, %v742
    %vm744 = vweird.f32 %v738
    %vm745 = vweird.f32 %v739
    %vm746 = vmor %vm744, %vm745
    %v747 = vsel %vm746, %v739, %v743
    %v748 = vand.u32 2147483647, %v738
    %vm749 = vcmp.eq.f32.partialorder %v748, 8.507059e+37
    %v750 = vand.u32 %v738, 2147483648
    %v751 = vor.u32 1.1754944e-38, %v750
    %v752 = vsel %vm749, %v751, %v747
    %v753 = vmul.f32 1.0, %v752
    %v754 = vmul.f32 %v733, %v485
    %v755 = vadd.f32 %v711, %v754
    %v756 = vtanh.pop %v755
    %v757 = vsub.f32 1.0, %v753
    %v758 = vmul.f32 %v757, %v756
    %v759 = vmul.f32 %v753, %v279
    %v760 = vadd.f32 %v758, %v759
    %761 = vst [vmem:[#allocation18] sm:$0xff] %v760
    %v762 = vpack.c.bf16 %v760, %v760
    %v763 = vld [vmem:[#allocation9] sm:$0xf]
    %v764 = vld [vmem:[#allocation9 + $0x4] sm:$0xf]
    %v765 = vld [vmem:[#allocation9 + $0x8] sm:$0xf]
    %v766 = vld [vmem:[#allocation9 + $0xc] sm:$0xf]
    %v767 = vld [vmem:[#allocation9 + $0x10] sm:$0xf]
    %v768 = vld [vmem:[#allocation9 + $0x14] sm:$0xf]
    %v769 = vld [vmem:[#allocation9 + $0x18] sm:$0xf]
    %v770 = vld [vmem:[#allocation9 + $0x1c] sm:$0xf]
    %v771 = vld [vmem:[#allocation9 + $0x20] sm:$0xf]
    %v772 = vld [vmem:[#allocation9 + $0x24] sm:$0xf]
    %v773 = vld [vmem:[#allocation9 + $0x28] sm:$0xf]
    %v774 = vld [vmem:[#allocation9 + $0x2c] sm:$0xf]
    %v775 = vld [vmem:[#allocation9 + $0x30] sm:$0xf]
    %v776 = vld [vmem:[#allocation9 + $0x34] sm:$0xf]
    %v777 = vld [vmem:[#allocation9 + $0x38] sm:$0xf]
    %v778 = vld [vmem:[#allocation9 + $0x3c] sm:$0xf]
    %v779 = vunpack.c.l.bf16 %v763
    %v780 = vunpack.c.l.bf16 %v764
    %v781 = vunpack.c.l.bf16 %v765
    %v782 = vunpack.c.l.bf16 %v766
    %v783 = vunpack.c.l.bf16 %v767
    %v784 = vunpack.c.l.bf16 %v768
    %v785 = vunpack.c.l.bf16 %v769
    %v786 = vunpack.c.l.bf16 %v770
    %v787 = vunpack.c.l.bf16 %v771
    %v788 = vunpack.c.l.bf16 %v772
    %v789 = vunpack.c.l.bf16 %v773
    %v790 = vunpack.c.l.bf16 %v774
    %v791 = vunpack.c.l.bf16 %v775
    %v792 = vunpack.c.l.bf16 %v776
    %v793 = vunpack.c.l.bf16 %v777
    %v794 = vunpack.c.l.bf16 %v778
    %v796 = vrot.slane %v760, 1
    %v797 = vrot.slane %v760, 2
    %v798 = vrot.slane %v760, 3
    %v799 = vrot.slane %v760, 4
    %v800 = vrot.slane %v760, 5
    %v801 = vrot.slane %v760, 6
    %v802 = vrot.slane %v760, 7
    %v803 = vperm.slane %v760, 0
    %v804 = vperm.slane %v796, 0
    %v805 = vperm.slane %v797, 0
    %v806 = vperm.slane %v798, 0
    %v807 = vperm.slane %v799, 0
    %v808 = vperm.slane %v800, 0
    %v809 = vperm.slane %v801, 0
    %v810 = vperm.slane %v802, 0
    %v819 = vmul.f32 %v779, %v803
    %v820 = vmul.f32 %v780, %v803
    %v821 = vmul.f32 %v781, %v804
    %v822 = vmul.f32 %v782, %v804
    %v823 = vmul.f32 %v783, %v805
    %v824 = vmul.f32 %v784, %v805
    %v825 = vmul.f32 %v785, %v806
    %v826 = vmul.f32 %v786, %v806
    %v827 = vmul.f32 %v787, %v807
    %v828 = vmul.f32 %v788, %v807
    %v829 = vmul.f32 %v789, %v808
    %v830 = vmul.f32 %v790, %v808
    %v831 = vmul.f32 %v791, %v809
    %v832 = vmul.f32 %v792, %v809
    %v833 = vmul.f32 %v793, %v810
    %v834 = vmul.f32 %v794, %v810
    %835 = vadd.xlane.f32.xlu0 %v819
    %v836 = vpop.xlane.xlu0 %835
    %837 = vadd.xlane.f32.xlu0 %v820
    %v838 = vpop.xlane.xlu0 %837
    %839 = vadd.xlane.f32.xlu0 %v821
    %v840 = vpop.xlane.xlu0 %839
    %841 = vadd.xlane.f32.xlu0 %v822
    %v842 = vpop.xlane.xlu0 %841
    %843 = vadd.xlane.f32.xlu0 %v823
    %v844 = vpop.xlane.xlu0 %843
    %845 = vadd.xlane.f32.xlu0 %v824
    %v846 = vpop.xlane.xlu0 %845
    %847 = vadd.xlane.f32.xlu0 %v825
    %v848 = vpop.xlane.xlu0 %847
    %849 = vadd.xlane.f32.xlu0 %v826
    %v850 = vpop.xlane.xlu0 %849
    %851 = vadd.xlane.f32.xlu0 %v827
    %v852 = vpop.xlane.xlu0 %851
    %853 = vadd.xlane.f32.xlu0 %v828
    %v854 = vpop.xlane.xlu0 %853
    %855 = vadd.xlane.f32.xlu0 %v829
    %v856 = vpop.xlane.xlu0 %855
    %857 = vadd.xlane.f32.xlu0 %v830
    %v858 = vpop.xlane.xlu0 %857
    %859 = vadd.xlane.f32.xlu0 %v831
    %v860 = vpop.xlane.xlu0 %859
    %861 = vadd.xlane.f32.xlu0 %v832
    %v862 = vpop.xlane.xlu0 %861
    %863 = vadd.xlane.f32.xlu0 %v833
    %v864 = vpop.xlane.xlu0 %863
    %865 = vadd.xlane.f32.xlu0 %v834
    %v866 = vpop.xlane.xlu0 %865
    %v883 = vlaneseq
    %v884 = vand.u32 %v883, 127
    %v885 = vperm.slane %v836, %v884
    %v886 = vadd.s32 %v884, 4294967288
    %v887 = vperm.slane %v838, %v886
    %vm888 = vcmask 130112
    %v889 = vsel %vm888, %v887, %v885
    %v890 = vperm.slane %v840, %v884
    %v891 = vperm.slane %v842, %v886
    %v892 = vsel %vm888, %v891, %v890
    %v893 = vperm.slane %v844, %v884
    %v894 = vperm.slane %v846, %v886
    %v895 = vsel %vm888, %v894, %v893
    %v896 = vperm.slane %v848, %v884
    %v897 = vperm.slane %v850, %v886
    %v898 = vsel %vm888, %v897, %v896
    %v899 = vperm.slane %v852, %v884
    %v900 = vperm.slane %v854, %v886
    %v901 = vsel %vm888, %v900, %v899
    %v902 = vperm.slane %v856, %v884
    %v903 = vperm.slane %v858, %v886
    %v904 = vsel %vm888, %v903, %v902
    %v905 = vperm.slane %v860, %v884
    %v906 = vperm.slane %v862, %v886
    %v907 = vsel %vm888, %v906, %v905
    %v908 = vperm.slane %v864, %v884
    %v909 = vperm.slane %v866, %v886
    %v910 = vsel %vm888, %v909, %v908
    %vm911 = vcmask 1041409
    %v912 = vsel %vm911, %v892, %v889
    %vm913 = vcmask 1042434
    %v914 = vsel %vm913, %v895, %v912
    %vm915 = vcmask 1043459
    %v916 = vsel %vm915, %v898, %v914
    %vm917 = vcmask 1044484
    %v918 = vsel %vm917, %v901, %v916
    %vm919 = vcmask 1045509
    %v920 = vsel %vm919, %v904, %v918
    %vm921 = vcmask 1046534
    %v922 = vsel %vm921, %v907, %v920
    %vm923 = vcmask 1047559
    %v924 = vsel %vm923, %v910, %v922
    %vm926 = vcmask 130048
    %v927 = vsel %vm926, %v924, -inf
    %928 = vmax.xlane.f32.xlu0 %v927
    %v929 = vpop.xlane.xlu0 %928
    %v931 = vperm.slane %v929, 0
    %v932 = vperm.slane %v929, 1
    %v933 = vperm.slane %v929, 2
    %v934 = vperm.slane %v929, 3
    %v935 = vperm.slane %v929, 4
    %v936 = vperm.slane %v929, 5
    %v937 = vperm.slane %v929, 6
    %v938 = vperm.slane %v929, 7
    %v947 = vsub.f32 %v836, %v931
    %v948 = vsub.f32 %v838, %v931
    %v949 = vsub.f32 %v840, %v932
    %v950 = vsub.f32 %v842, %v932
    %v951 = vsub.f32 %v844, %v933
    %v952 = vsub.f32 %v846, %v933
    %v953 = vsub.f32 %v848, %v934
    %v954 = vsub.f32 %v850, %v934
    %v955 = vsub.f32 %v852, %v935
    %v956 = vsub.f32 %v854, %v935
    %v957 = vsub.f32 %v856, %v936
    %v958 = vsub.f32 %v858, %v936
    %v959 = vsub.f32 %v860, %v937
    %v960 = vsub.f32 %v862, %v937
    %v961 = vsub.f32 %v864, %v938
    %v962 = vsub.f32 %v866, %v938
    %v963 = vmul.f32 %v947, 1.442695
    %v964 = vpow.pop %v963
    %v965 = vmul.f32 %v948, 1.442695
    %v966 = vpow.pop %v965
    %v967 = vmul.f32 %v949, 1.442695
    %v968 = vpow.pop %v967
    %v969 = vmul.f32 %v950, 1.442695
    %v970 = vpow.pop %v969
    %v971 = vmul.f32 %v951, 1.442695
    %v972 = vpow.pop %v971
    %v973 = vmul.f32 %v952, 1.442695
    %v974 = vpow.pop %v973
    %v975 = vmul.f32 %v953, 1.442695
    %v976 = vpow.pop %v975
    %v977 = vmul.f32 %v954, 1.442695
    %v978 = vpow.pop %v977
    %v979 = vmul.f32 %v955, 1.442695
    %v980 = vpow.pop %v979
    %v981 = vmul.f32 %v956, 1.442695
    %v982 = vpow.pop %v981
    %v983 = vmul.f32 %v957, 1.442695
    %v984 = vpow.pop %v983
    %v985 = vmul.f32 %v958, 1.442695
    %v986 = vpow.pop %v985
    %v987 = vmul.f32 %v959, 1.442695
    %v988 = vpow.pop %v987
    %v989 = vmul.f32 %v960, 1.442695
    %v990 = vpow.pop %v989
    %v991 = vmul.f32 %v961, 1.442695
    %v992 = vpow.pop %v991
    %v993 = vmul.f32 %v962, 1.442695
    %v994 = vpow.pop %v993
    %1011 = vset.pattern.permute.xlu0 0
    %1012 = vperm.xlu0 %1011, %v964
    %v1013 = vpop.permute.xlu0 %1012
    %1014 = vset.pattern.permute.xlu0 0
    %1015 = vperm.xlu0 %1014, %v966
    %v1016 = vpop.permute.xlu0 %1015
    %1017 = vset.pattern.permute.xlu0 0
    %1018 = vperm.xlu0 %1017, %v968
    %v1019 = vpop.permute.xlu0 %1018
    %1020 = vset.pattern.permute.xlu0 0
    %1021 = vperm.xlu0 %1020, %v970
    %v1022 = vpop.permute.xlu0 %1021
    %1023 = vset.pattern.permute.xlu0 0
    %1024 = vperm.xlu0 %1023, %v972
    %v1025 = vpop.permute.xlu0 %1024
    %1026 = vset.pattern.permute.xlu0 0
    %1027 = vperm.xlu0 %1026, %v974
    %v1028 = vpop.permute.xlu0 %1027
    %1029 = vset.pattern.permute.xlu0 0
    %1030 = vperm.xlu0 %1029, %v976
    %v1031 = vpop.permute.xlu0 %1030
    %1032 = vset.pattern.permute.xlu0 0
    %1033 = vperm.xlu0 %1032, %v978
    %v1034 = vpop.permute.xlu0 %1033
    %1035 = vset.pattern.permute.xlu0 0
    %1036 = vperm.xlu0 %1035, %v980
    %v1037 = vpop.permute.xlu0 %1036
    %1038 = vset.pattern.permute.xlu0 0
    %1039 = vperm.xlu0 %1038, %v982
    %v1040 = vpop.permute.xlu0 %1039
    %1041 = vset.pattern.permute.xlu0 0
    %1042 = vperm.xlu0 %1041, %v984
    %v1043 = vpop.permute.xlu0 %1042
    %1044 = vset.pattern.permute.xlu0 0
    %1045 = vperm.xlu0 %1044, %v986
    %v1046 = vpop.permute.xlu0 %1045
    %1047 = vset.pattern.permute.xlu0 0
    %1048 = vperm.xlu0 %1047, %v988
    %v1049 = vpop.permute.xlu0 %1048
    %1050 = vset.pattern.permute.xlu0 0
    %1051 = vperm.xlu0 %1050, %v990
    %v1052 = vpop.permute.xlu0 %1051
    %1053 = vset.pattern.permute.xlu0 0
    %1054 = vperm.xlu0 %1053, %v992
    %v1055 = vpop.permute.xlu0 %1054
    %1056 = vset.pattern.permute.xlu0 0
    %1057 = vperm.xlu0 %1056, %v994
    %v1058 = vpop.permute.xlu0 %1057
    %v1059 = vperm.slane %v1013, %v884
    %v1060 = vperm.slane %v1016, %v886
    %v1061 = vsel %vm888, %v1060, %v1059
    %v1062 = vperm.slane %v1019, %v884
    %v1063 = vperm.slane %v1022, %v886
    %v1064 = vsel %vm888, %v1063, %v1062
    %v1065 = vperm.slane %v1025, %v884
    %v1066 = vperm.slane %v1028, %v886
    %v1067 = vsel %vm888, %v1066, %v1065
    %v1068 = vperm.slane %v1031, %v884
    %v1069 = vperm.slane %v1034, %v886
    %v1070 = vsel %vm888, %v1069, %v1068
    %v1071 = vperm.slane %v1037, %v884
    %v1072 = vperm.slane %v1040, %v886
    %v1073 = vsel %vm888, %v1072, %v1071
    %v1074 = vperm.slane %v1043, %v884
    %v1075 = vperm.slane %v1046, %v886
    %v1076 = vsel %vm888, %v1075, %v1074
    %v1077 = vperm.slane %v1049, %v884
    %v1078 = vperm.slane %v1052, %v886
    %v1079 = vsel %vm888, %v1078, %v1077
    %v1080 = vperm.slane %v1055, %v884
    %v1081 = vperm.slane %v1058, %v886
    %v1082 = vsel %vm888, %v1081, %v1080
    %v1083 = vsel %vm911, %v1064, %v1061
    %v1084 = vsel %vm913, %v1067, %v1083
    %v1085 = vsel %vm915, %v1070, %v1084
    %v1086 = vsel %vm917, %v1073, %v1085
    %v1087 = vsel %vm919, %v1076, %v1086
    %v1088 = vsel %vm921, %v1079, %v1087
    %v1089 = vsel %vm923, %v1082, %v1088
    %v1091 = vsel %vm926, %v1089, 0.0
    %1092 = vadd.xlane.f32.xlu0 %v1091
    %v1093 = vpop.xlane.xlu0 %1092
    %v1094 = vrcp.pop %v1093
    %v1096 = vperm.slane %v1094, 0
    %v1097 = vperm.slane %v1094, 1
    %v1098 = vperm.slane %v1094, 2
    %v1099 = vperm.slane %v1094, 3
    %v1100 = vperm.slane %v1094, 4
    %v1101 = vperm.slane %v1094, 5
    %v1102 = vperm.slane %v1094, 6
    %v1103 = vperm.slane %v1094, 7
    %v1112 = vmul.f32 %v964, %v1096
    %v1113 = vmul.f32 %v966, %v1096
    %v1114 = vmul.f32 %v968, %v1097
    %v1115 = vmul.f32 %v970, %v1097
    %v1116 = vmul.f32 %v972, %v1098
    %v1117 = vmul.f32 %v974, %v1098
    %v1118 = vmul.f32 %v976, %v1099
    %v1119 = vmul.f32 %v978, %v1099
    %v1120 = vmul.f32 %v980, %v1100
    %v1121 = vmul.f32 %v982, %v1100
    %v1122 = vmul.f32 %v984, %v1101
    %v1123 = vmul.f32 %v986, %v1101
    %v1124 = vmul.f32 %v988, %v1102
    %v1125 = vmul.f32 %v990, %v1102
    %v1126 = vmul.f32 %v992, %v1103
    %v1127 = vmul.f32 %v994, %v1103
    %1129 = vset.pattern.permute.xlu0 0
    %1130 = vperm.xlu0 %1129, %v1112
    %v1131 = vpop.permute.xlu0 %1130
    %1134 = vset.pattern.permute.xlu0 0
    %1135 = vperm.xlu0 %1134, %v1113
    %v1136 = vpop.permute.xlu0 %1135
    %1139 = vset.pattern.permute.xlu0 0
    %1140 = vperm.xlu0 %1139, %v1114
    %v1141 = vpop.permute.xlu0 %1140
    %1144 = vset.pattern.permute.xlu0 0
    %1145 = vperm.xlu0 %1144, %v1115
    %v1146 = vpop.permute.xlu0 %1145
    %1149 = vset.pattern.permute.xlu0 0
    %1150 = vperm.xlu0 %1149, %v1116
    %v1151 = vpop.permute.xlu0 %1150
    %1154 = vset.pattern.permute.xlu0 0
    %1155 = vperm.xlu0 %1154, %v1117
    %v1156 = vpop.permute.xlu0 %1155
    %1159 = vset.pattern.permute.xlu0 0
    %1160 = vperm.xlu0 %1159, %v1118
    %v1161 = vpop.permute.xlu0 %1160
    %1164 = vset.pattern.permute.xlu0 0
    %1165 = vperm.xlu0 %1164, %v1119
    %v1166 = vpop.permute.xlu0 %1165
    %1169 = vset.pattern.permute.xlu0 0
    %1170 = vperm.xlu0 %1169, %v1120
    %v1171 = vpop.permute.xlu0 %1170
    %1174 = vset.pattern.permute.xlu0 0
    %1175 = vperm.xlu0 %1174, %v1121
    %v1176 = vpop.permute.xlu0 %1175
    %1179 = vset.pattern.permute.xlu0 0
    %1180 = vperm.xlu0 %1179, %v1122
    %v1181 = vpop.permute.xlu0 %1180
    %1184 = vset.pattern.permute.xlu0 0
    %1185 = vperm.xlu0 %1184, %v1123
    %v1186 = vpop.permute.xlu0 %1185
    %1189 = vset.pattern.permute.xlu0 0
    %1190 = vperm.xlu0 %1189, %v1124
    %v1191 = vpop.permute.xlu0 %1190
    %1194 = vset.pattern.permute.xlu0 0
    %1195 = vperm.xlu0 %1194, %v1125
    %v1196 = vpop.permute.xlu0 %1195
    %1199 = vset.pattern.permute.xlu0 0
    %1200 = vperm.xlu0 %1199, %v1126
    %v1201 = vpop.permute.xlu0 %1200
    %1204 = vset.pattern.permute.xlu0 0
    %1205 = vperm.xlu0 %1204, %v1127
    %v1206 = vpop.permute.xlu0 %1205
    %v1208 = vmul.f32 %v779, %v1131
    %v1209 = vmul.f32 %v780, %v1136
    %v1210 = vmul.f32 %v781, %v1141
    %v1211 = vmul.f32 %v782, %v1146
    %v1212 = vmul.f32 %v783, %v1151
    %v1213 = vmul.f32 %v784, %v1156
    %v1214 = vmul.f32 %v785, %v1161
    %v1215 = vmul.f32 %v786, %v1166
    %v1216 = vmul.f32 %v787, %v1171
    %v1217 = vmul.f32 %v788, %v1176
    %v1218 = vmul.f32 %v789, %v1181
    %v1219 = vmul.f32 %v790, %v1186
    %v1220 = vmul.f32 %v791, %v1191
    %v1221 = vmul.f32 %v792, %v1196
    %v1222 = vmul.f32 %v793, %v1201
    %v1223 = vmul.f32 %v794, %v1206
    %v1224 = vadd.f32 %v1208, %v1209
    %v1225 = vrot.slane %v1224, 4
    %v1226 = vadd.f32 %v1224, %v1225
    %v1227 = vrot.slane %v1226, 2
    %v1228 = vadd.f32 %v1226, %v1227
    %v1229 = vrot.slane %v1228, 1
    %v1230 = vadd.f32 %v1228, %v1229
    %v1231 = vadd.f32 %v1210, %v1211
    %v1232 = vrot.slane %v1231, 4
    %v1233 = vadd.f32 %v1231, %v1232
    %v1234 = vrot.slane %v1233, 2
    %v1235 = vadd.f32 %v1233, %v1234
    %v1236 = vrot.slane %v1235, 1
    %v1237 = vadd.f32 %v1235, %v1236
    %v1238 = vadd.f32 %v1212, %v1213
    %v1239 = vrot.slane %v1238, 4
    %v1240 = vadd.f32 %v1238, %v1239
    %v1241 = vrot.slane %v1240, 2
    %v1242 = vadd.f32 %v1240, %v1241
    %v1243 = vrot.slane %v1242, 1
    %v1244 = vadd.f32 %v1242, %v1243
    %v1245 = vadd.f32 %v1214, %v1215
    %v1246 = vrot.slane %v1245, 4
    %v1247 = vadd.f32 %v1245, %v1246
    %v1248 = vrot.slane %v1247, 2
    %v1249 = vadd.f32 %v1247, %v1248
    %v1250 = vrot.slane %v1249, 1
    %v1251 = vadd.f32 %v1249, %v1250
    %v1252 = vadd.f32 %v1216, %v1217
    %v1253 = vrot.slane %v1252, 4
    %v1254 = vadd.f32 %v1252, %v1253
    %v1255 = vrot.slane %v1254, 2
    %v1256 = vadd.f32 %v1254, %v1255
    %v1257 = vrot.slane %v1256, 1
    %v1258 = vadd.f32 %v1256, %v1257
    %v1259 = vadd.f32 %v1218, %v1219
    %v1260 = vrot.slane %v1259, 4
    %v1261 = vadd.f32 %v1259, %v1260
    %v1262 = vrot.slane %v1261, 2
    %v1263 = vadd.f32 %v1261, %v1262
    %v1264 = vrot.slane %v1263, 1
    %v1265 = vadd.f32 %v1263, %v1264
    %v1266 = vadd.f32 %v1220, %v1221
    %v1267 = vrot.slane %v1266, 4
    %v1268 = vadd.f32 %v1266, %v1267
    %v1269 = vrot.slane %v1268, 2
    %v1270 = vadd.f32 %v1268, %v1269
    %v1271 = vrot.slane %v1270, 1
    %v1272 = vadd.f32 %v1270, %v1271
    %v1273 = vadd.f32 %v1222, %v1223
    %v1274 = vrot.slane %v1273, 4
    %v1275 = vadd.f32 %v1273, %v1274
    %v1276 = vrot.slane %v1275, 2
    %v1277 = vadd.f32 %v1275, %v1276
    %v1278 = vrot.slane %v1277, 1
    %v1279 = vadd.f32 %v1277, %v1278
    %v1280 = vpack.c.bf16 %v1230, %v1230
    %v1281 = vpack.c.bf16 %v1237, %v1237
    %v1282 = vpack.c.bf16 %v1244, %v1244
    %v1283 = vpack.c.bf16 %v1251, %v1251
    %v1284 = vpack.c.bf16 %v1258, %v1258
    %v1285 = vpack.c.bf16 %v1265, %v1265
    %v1286 = vpack.c.bf16 %v1272, %v1272
    %v1287 = vpack.c.bf16 %v1279, %v1279
    %v1288 = vld [vmem:[#allocation14] sm:$0xf]
    %v1289 = vld [vmem:[#allocation14 + $0x4] sm:$0xf]
    %v1290 = vld [vmem:[#allocation14 + $0x8] sm:$0xf]
    %v1291 = vld [vmem:[#allocation14 + $0xc] sm:$0xf]
    %v1292 = vld [vmem:[#allocation14 + $0x10] sm:$0xf]
    %v1293 = vld [vmem:[#allocation14 + $0x14] sm:$0xf]
    %v1294 = vld [vmem:[#allocation14 + $0x18] sm:$0xf]
    %v1295 = vld [vmem:[#allocation14 + $0x1c] sm:$0xf]
    %v1296 = vld [vmem:[#allocation14 + $0x20] sm:$0xf]
    %v1297 = vld [vmem:[#allocation14 + $0x24] sm:$0xf]
    %v1298 = vld [vmem:[#allocation14 + $0x28] sm:$0xf]
    %v1299 = vld [vmem:[#allocation14 + $0x2c] sm:$0xf]
    %v1300 = vld [vmem:[#allocation14 + $0x30] sm:$0xf]
    %v1301 = vld [vmem:[#allocation14 + $0x34] sm:$0xf]
    %v1302 = vld [vmem:[#allocation14 + $0x38] sm:$0xf]
    %v1303 = vld [vmem:[#allocation14 + $0x3c] sm:$0xf]
    %v1304 = vld [vmem:[#allocation15] sm:$0xf]
    %v1305 = vld [vmem:[#allocation15 + $0x4] sm:$0xf]
    %v1306 = vld [vmem:[#allocation15 + $0x8] sm:$0xf]
    %v1307 = vld [vmem:[#allocation15 + $0xc] sm:$0xf]
    %v1308 = vld [vmem:[#allocation15 + $0x10] sm:$0xf]
    %v1309 = vld [vmem:[#allocation15 + $0x14] sm:$0xf]
    %v1310 = vld [vmem:[#allocation15 + $0x18] sm:$0xf]
    %v1311 = vld [vmem:[#allocation15 + $0x1c] sm:$0xf]
    %v1312 = vld [vmem:[#allocation15 + $0x20] sm:$0xf]
    %v1313 = vld [vmem:[#allocation15 + $0x24] sm:$0xf]
    %v1314 = vld [vmem:[#allocation15 + $0x28] sm:$0xf]
    %v1315 = vld [vmem:[#allocation15 + $0x2c] sm:$0xf]
    %v1316 = vld [vmem:[#allocation15 + $0x30] sm:$0xf]
    %v1317 = vld [vmem:[#allocation15 + $0x34] sm:$0xf]
    %v1318 = vld [vmem:[#allocation15 + $0x38] sm:$0xf]
    %v1319 = vld [vmem:[#allocation15 + $0x3c] sm:$0xf]
    %v1336 = vunpack.c.l.b16 %v1304
    %v1337 = vunpack.c.l.b16 %v1305
    %v1338 = vunpack.c.l.b16 %v1306
    %v1339 = vunpack.c.l.b16 %v1307
    %v1340 = vunpack.c.l.b16 %v1308
    %v1341 = vunpack.c.l.b16 %v1309
    %v1342 = vunpack.c.l.b16 %v1310
    %v1343 = vunpack.c.l.b16 %v1311
    %v1344 = vunpack.c.l.b16 %v1312
    %v1345 = vunpack.c.l.b16 %v1313
    %v1346 = vunpack.c.l.b16 %v1314
    %v1347 = vunpack.c.l.b16 %v1315
    %v1348 = vunpack.c.l.b16 %v1316
    %v1349 = vunpack.c.l.b16 %v1317
    %v1350 = vunpack.c.l.b16 %v1318
    %v1351 = vunpack.c.l.b16 %v1319
    %v1352 = vpack.c.b16 %v1337, %v1336
    %v1353 = vpack.c.b16 %v1339, %v1338
    %v1354 = vpack.c.b16 %v1341, %v1340
    %v1355 = vpack.c.b16 %v1343, %v1342
    %v1356 = vpack.c.b16 %v1345, %v1344
    %v1357 = vpack.c.b16 %v1347, %v1346
    %v1358 = vpack.c.b16 %v1349, %v1348
    %v1359 = vpack.c.b16 %v1351, %v1350
    %1368 = vmatpush.bf16.msra.mxu0 %v1359
    %1369 = vmatpush.bf16.msra.mxu0 %v1358
    %1370 = vmatpush.bf16.msra.mxu0 %v1357
    %1371 = vmatpush.bf16.msra.mxu0 %v1356
    %1372 = vmatpush.bf16.msra.mxu0 %v1355
    %1373 = vmatpush.bf16.msra.mxu0 %v1354
    %1374 = vmatpush.bf16.msra.mxu0 %v1353
    %1375 = vmatpush.bf16.msra.mxu0 %v1352
    %1376 = vmatmul.bf16.gmra.mxu0 %v762
    %v1377 = vpop.f32.mrf.mxu0
    %v1378 = vadd.f32 0.0, %v1377
    %v1379 = vpop.f32.mrf.mxu0
    %1380 = vdwg.mxu0
    %v1389 = vunpack.c.l.b16 %v1280
    %v1390 = vunpack.c.l.b16 %v1281
    %v1391 = vunpack.c.l.b16 %v1282
    %v1392 = vunpack.c.l.b16 %v1283
    %v1393 = vunpack.c.l.b16 %v1284
    %v1394 = vunpack.c.l.b16 %v1285
    %v1395 = vunpack.c.l.b16 %v1286
    %v1396 = vunpack.c.l.b16 %v1287
    %v1397 = vsel %vm911, %v1390, %v1389
    %v1398 = vsel %vm913, %v1391, %v1397
    %v1399 = vsel %vm915, %v1392, %v1398
    %v1400 = vsel %vm917, %v1393, %v1399
    %v1401 = vsel %vm919, %v1394, %v1400
    %v1402 = vsel %vm921, %v1395, %v1401
    %v1403 = vsel %vm923, %v1396, %v1402
    %v1404 = vpack.c.b16 %v1403, %v1403
    %v1422 = vunpack.c.l.b16 %v1288
    %v1423 = vunpack.c.l.b16 %v1289
    %v1424 = vunpack.c.l.b16 %v1290
    %v1425 = vunpack.c.l.b16 %v1291
    %v1426 = vunpack.c.l.b16 %v1292
    %v1427 = vunpack.c.l.b16 %v1293
    %v1428 = vunpack.c.l.b16 %v1294
    %v1429 = vunpack.c.l.b16 %v1295
    %v1430 = vunpack.c.l.b16 %v1296
    %v1431 = vunpack.c.l.b16 %v1297
    %v1432 = vunpack.c.l.b16 %v1298
    %v1433 = vunpack.c.l.b16 %v1299
    %v1434 = vunpack.c.l.b16 %v1300
    %v1435 = vunpack.c.l.b16 %v1301
    %v1436 = vunpack.c.l.b16 %v1302
    %v1437 = vunpack.c.l.b16 %v1303
    %v1438 = vpack.c.b16 %v1423, %v1422
    %v1439 = vpack.c.b16 %v1425, %v1424
    %v1440 = vpack.c.b16 %v1427, %v1426
    %v1441 = vpack.c.b16 %v1429, %v1428
    %v1442 = vpack.c.b16 %v1431, %v1430
    %v1443 = vpack.c.b16 %v1433, %v1432
    %v1444 = vpack.c.b16 %v1435, %v1434
    %v1445 = vpack.c.b16 %v1437, %v1436
    %1454 = vmatpush.bf16.msra.mxu0 %v1445
    %1455 = vmatpush.bf16.msra.mxu0 %v1444
    %1456 = vmatpush.bf16.msra.mxu0 %v1443
    %1457 = vmatpush.bf16.msra.mxu0 %v1442
    %1458 = vmatpush.bf16.msra.mxu0 %v1441
    %1459 = vmatpush.bf16.msra.mxu0 %v1440
    %1460 = vmatpush.bf16.msra.mxu0 %v1439
    %1461 = vmatpush.bf16.msra.mxu0 %v1438
    %1462 = vmatmul.bf16.gmra.mxu0 %v1404
    %v1463 = vpop.f32.mrf.mxu0
    %v1464 = vadd.f32 %v1378, %v1463
    %v1465 = vpop.f32.mrf.mxu0
    %1466 = vdwg.mxu0
    %v1467 = vld [vmem:[%s10] sm:$0x1]
    %v1469 = vperm.slane %v1467, 0
    %v1471 = vadd.f32 %v1464, %v1469
    %v1472 = vtanh.pop %v1471
    %v1473 = vpack.c.bf16 %v1472, %v1472
    %1474 = vst [vmem:[#allocation17] sm:$0xf] %v1473
    // Predicated region
    $region102: #{tpu_custom_call.1} parent=1 // pred_check
      _
    $region103: #{tpu_custom_call.1} parent=1 // pred_check_branch
      %1476 = sbr.rel (0) target = $region105
    $region104: #{tpu_custom_call.1} parent=1 // pred_region
      %1478 = vsyncadd [#allocation6], 0
      %s1480 = sshll.u32 [#allocation17], 4
      %s1481 = int_to_ptr.vmem [resolvable:$true] %s1480
      %s1482 = sshll.u32 %s11, 4
      %s1483 = int_to_ptr.hbm [resolvable:$true] %s1482
      %1485 = dma.vmem_to_hbm [thread:$0]  %s1481, 64, %s1483, [#allocation6]
    $region105: #{tpu_custom_call.1} parent=1 // pred_fallthru
      _
    // Predicated region
    $region106: #{tpu_custom_call.1} parent=1 // pred_check
      _
    $region107: #{tpu_custom_call.1} parent=1 // pred_check_branch
      %1487 = sbr.rel (0) target = $region109
    $region108: #{tpu_custom_call.1} parent=1 // pred_region
      %1489 = vsyncadd [#allocation19], 0
      %s1491 = sshll.u32 [#allocation18], 4
      %s1492 = int_to_ptr.vmem [resolvable:$true] %s1491
      %s1493 = sshll.u32 %s12, 4
      %s1494 = int_to_ptr.hbm [resolvable:$true] %s1493
      %1496 = dma.vmem_to_hbm [thread:$0]  %s1492, 128, %s1494, [#allocation19]
    $region109: #{tpu_custom_call.1} parent=1 // pred_fallthru
      _
    // Predicated region
    $region110: #{tpu_custom_call.1} parent=1 // pred_check
      _
    $region111: #{tpu_custom_call.1} parent=1 // pred_check_branch
      %1498 = sbr.rel (0) target = $region113
    $region112: #{tpu_custom_call.1} parent=1 // pred_region
      %1500 = dma.done [#allocation6], 64
    $region113: #{tpu_custom_call.1} parent=1 // pred_fallthru
      _
    // Predicated region
    $region114: #{tpu_custom_call.1} parent=1 // pred_check
      _
    $region115: #{tpu_custom_call.1} parent=1 // pred_check_branch
      %1502 = sbr.rel (0) target = $region117
    $region116: #{tpu_custom_call.1} parent=1 // pred_region
      %1504 = dma.done [#allocation19], 128
    $region117: #{tpu_custom_call.1} parent=1 // pred_fallthru
      _
    %1505 = vsyncpa [#allocation5], 1
    %1506 = vsyncpa [#allocation10], 1
    %1507 = vsyncpa [#allocation13], 1
    %1508 = vsyncpa [#allocation16], 1
    %1509 = vsyncpa [#allocation6], 1
    %1510 = vsyncpa [#allocation19], 1
    %1511 = vsyncpa [#allocation7], 1
  %1512 = vsyncmov [#allocation3]
  %s1513 = vpop.sfrf %1512
  %p1514 = scmp.eq.s32.totalorder %s1513, 0
  %p1515 = pneg %p1514
  %1517 = shalt.err (%p1515)
  %s1518 = scalar_lea.sflag [#allocation3], 1
  %1519 = vsyncmov %s1518
  %s1520 = vpop.sfrf %1519
  %p1521 = scmp.eq.s32.totalorder %s1520, 0
  %p1522 = pneg %p1521
  %1524 = shalt.err (%p1522)
  %s1525 = scalar_lea.sflag [#allocation3], 2
  %1526 = vsyncmov %s1525
  %s1527 = vpop.sfrf %1526
  %p1528 = scmp.eq.s32.totalorder %s1527, 0
  %p1529 = pneg %p1528
  %1531 = shalt.err (%p1529)
  %s1532 = scalar_lea.sflag [#allocation3], 3
  %1533 = vsyncmov %s1532
  %s1534 = vpop.sfrf %1533
  %p1535 = scmp.eq.s32.totalorder %s1534, 0
  %p1536 = pneg %p1535
  %1538 = shalt.err (%p1536)
  %s1539 = scalar_lea.sflag [#allocation3], 4
  %1540 = vsyncmov %s1539
  %s1541 = vpop.sfrf %1540
  %p1542 = scmp.eq.s32.totalorder %s1541, 0
  %p1543 = pneg %p1542
  %1545 = shalt.err (%p1543)
  %s1546 = scalar_lea.sflag [#allocation3], 5
  %1547 = vsyncmov %s1546
  %s1548 = vpop.sfrf %1547
  %p1549 = scmp.eq.s32.totalorder %s1548, 0
  %p1550 = pneg %p1549
  %1552 = shalt.err (%p1550)
  %s1553 = scalar_lea.sflag [#allocation3], 6
  %1554 = vsyncmov %s1553
  %s1555 = vpop.sfrf %1554
  %p1556 = scmp.eq.s32.totalorder %s1555, 0
  %p1557 = pneg %p1556
  %1559 = shalt.err (%p1557)
  %s1560 = scalar_lea.sflag [#allocation3], 7
  %1561 = vsyncmov %s1560
  %s1562 = vpop.sfrf %1561
  %p1563 = scmp.eq.s32.totalorder %s1562, 0
  %p1564 = pneg %p1563
  %1566 = shalt.err (%p1564)

</llo_original>
